<compile_context>
chip_gen: v6e
topology: v6e:2x2x1
jax: 0.10.0
libtpu: 0.0.40
codegen_flags: <defaults>
</compile_context>

<pallas_src>
import jax
import jax.numpy as jnp
from jax import lax
from jax.experimental import pallas as pl
from jax.experimental.pallas import tpu as pltpu

FEAT = 512  # fc1: 512->512, fc2: 512->512 (the cuda:0/cuda:1 split is a no-op here)


def mlp_kernel(x_ref, w1_ref, b1_ref, w2_ref, b2_ref, o_ref):
    # Activation tile -> bf16 on the VPU (cheap, hidden under the MXU).
    x = x_ref[...].astype(jnp.bfloat16)
    # fc1: (tm, 512) contracted with W1 (out, in) along dim 1  ==  x @ W1.T
    h = lax.dot_general(
        x, w1_ref[...],
        dimension_numbers=(((1,), (1,)), ((), ())),
        preferred_element_type=jnp.float32,
    ) + b1_ref[...]
    # fc2: same pattern; f32 accumulation, bf16 operands for the MXU.
    y = lax.dot_general(
        h.astype(jnp.bfloat16), w2_ref[...],
        dimension_numbers=(((1,), (1,)), ((), ())),
        preferred_element_type=jnp.float32,
    ) + b2_ref[...]
    o_ref[...] = y.astype(o_ref.dtype)


def model_parallel_nn_forward(x, w1, b1, w2, b2, *, tm=None):
    """Forward of ModelParallelNN: y = (x @ W1.T + b1) @ W2.T + b2.

    x: (B, 512) f32; w1, w2: (512, 512) in PyTorch (out, in) layout; b1, b2: (512,).
    """
    B, D = x.shape
    assert D == FEAT
    if tm is None:
        # 256 is a multiple of both the v5e 128-wide and the v6e/v7x 256-wide
        # MXU tiles, keeps the grid >= 2 for megacore sharding at B >= 512,
        # and the resulting tiles (x/out f32: 0.5 MiB each, double-buffered)
        # sit comfortably in VMEM. For tiny batches run a single grid step
        # with the whole batch resident (no per-step overhead, no padding).
        tm = 256 if B >= 256 else B
    grid_m = -(-B // tm)          # ceil-div
    B_pad = grid_m * tm
    x_in = jnp.pad(x, ((0, B_pad - B), (0, 0))) if B_pad != B else x

    # bf16 MXU operands (f32 accumulation happens inside the kernel). Casting
    # the weights once here halves their resident VMEM/DMA footprint and avoids
    # re-casting them on every grid step; biases stay f32 for the VPU add.
    w1_in = w1.astype(jnp.bfloat16)
    w2_in = w2.astype(jnp.bfloat16)
    b1_in = b1.reshape(1, FEAT).astype(jnp.float32)
    b2_in = b2.reshape(1, FEAT).astype(jnp.float32)

    out = pl.pallas_call(
        mlp_kernel,
        out_shape=jax.ShapeDtypeStruct((B_pad, FEAT), x.dtype),
        grid_spec=pltpu.PrefetchScalarGridSpec(
            num_scalar_prefetch=0,
            grid=(grid_m,),
            in_specs=[
                pl.BlockSpec((tm, FEAT), lambda i: (i, 0)),     # x tile
                pl.BlockSpec((FEAT, FEAT), lambda i: (0, 0)),   # W1 (out,in), resident
                pl.BlockSpec((1, FEAT), lambda i: (0, 0)),      # b1
                pl.BlockSpec((FEAT, FEAT), lambda i: (0, 0)),   # W2 (out,in), resident
                pl.BlockSpec((1, FEAT), lambda i: (0, 0)),      # b2
            ],
            out_specs=pl.BlockSpec((tm, FEAT), lambda i: (i, 0)),
        ),
        compiler_params=pltpu.CompilerParams(
            # Batch axis is embarrassingly parallel -> shards across v7x's two
            # TensorCores once grid_m >= 2.
            dimension_semantics=("parallel",),
            # ~5 MiB actually used at tm=256 (bf16 weights double-buffered,
            # f32 x/out tiles); 48 MiB leaves headroom for larger tm while
            # staying under v7x's 64 MiB physical VMEM.
            vmem_limit_bytes=48 * 1024 * 1024,
        ),
        # NOTE: the constant-index weight blocks are DMA'd only once by the
        # pipeline; default double-buffering merely costs ~1 MiB of VMEM, so we
        # keep the portable default instead of pipeline_mode=pl.Buffered(1).
    )(x_in, w1_in, b1_in, w2_in, b2_in)
    return out[:B] if B_pad != B else out


if __name__ == "__main__":
    key = jax.random.PRNGKey(0)
    kx, k1w, k1b, k2w, k2b = jax.random.split(key, 5)

    # Parameters fixed by the module (two nn.Linear(512, 512)); init mimics
    # nn.Linear's U(-1/sqrt(in), 1/sqrt(in)).
    bound = 1.0 / jnp.sqrt(jnp.float32(FEAT))
    w1 = jax.random.uniform(k1w, (FEAT, FEAT), jnp.float32, -bound, bound)  # (out, in)
    b1 = jax.random.uniform(k1b, (FEAT,), jnp.float32, -bound, bound)
    w2 = jax.random.uniform(k2w, (FEAT, FEAT), jnp.float32, -bound, bound)  # (out, in)
    b2 = jax.random.uniform(k2b, (FEAT,), jnp.float32, -bound, bound)

    def ref_fwd(xv):
        return (xv @ w1.T + b1) @ w2.T + b2

    ok = True
    # B=8: single grid step, whole batch resident (no padding, full-array block).
    # B=512: exercises the tm=256 tiled path (grid of 2 parallel steps).
    for B in (8, 512):
        x = jax.random.normal(kx, (B, FEAT), dtype=jnp.float32)
        out = jax.block_until_ready(model_parallel_nn_forward(x, w1, b1, w2, b2))
        ref = ref_fwd(x)
        ok &= out.shape == (B, FEAT)
        # bf16 MXU operands with f32 accumulation over K=512 -> ~1e-2-scale
        # absolute error, hence the loosened tolerance vs. the f32 reference.
        ok &= bool(jnp.allclose(out, ref, atol=3e-2, rtol=3e-2))
    assert ok
    print("KERNEL_OK")
</pallas_src>

<mosaic_0001>
module attributes {stable_mosaic.version = 11 : i64} {
  func.func @mlp_kernel(%arg0: i32, %arg1: memref<8x512xf32, #tpu.memory_space<vmem>>, %arg2: memref<512x512xbf16, #tpu.memory_space<vmem>>, %arg3: memref<1x512xf32, #tpu.memory_space<vmem>>, %arg4: memref<512x512xbf16, #tpu.memory_space<vmem>>, %arg5: memref<1x512xf32, #tpu.memory_space<vmem>>, %arg6: memref<8x512xf32, #tpu.memory_space<vmem>>) attributes {dimension_semantics = [#tpu.dimension_semantics<parallel>], iteration_bounds = array<i64: 1>, scalar_prefetch = 0 : i64, scratch_operands = 0 : i64, tpu.core_type = #tpu.core_type<tc>, window_params = [{transform_indices = @transform_0, window_bounds = array<i64: 8, 512>}, {pipeline_mode = #tpu.pipeline_mode<synchronous>, transform_indices = @transform_1, window_bounds = array<i64: 512, 512>}, {pipeline_mode = #tpu.pipeline_mode<synchronous>, transform_indices = @transform_2, window_bounds = array<i64: 1, 512>}, {pipeline_mode = #tpu.pipeline_mode<synchronous>, transform_indices = @transform_3, window_bounds = array<i64: 512, 512>}, {pipeline_mode = #tpu.pipeline_mode<synchronous>, transform_indices = @transform_4, window_bounds = array<i64: 1, 512>}, {transform_indices = @transform_5, window_bounds = array<i64: 8, 512>}]} {
    %c0 = arith.constant 0 : index
    %c0_0 = arith.constant 0 : index
    %0 = vector.load %arg1[%c0, %c0_0] : memref<8x512xf32, #tpu.memory_space<vmem>>, vector<8x512xf32>
    %1 = arith.truncf %0 : vector<8x512xf32> to vector<8x512xbf16>
    %c0_1 = arith.constant 0 : index
    %c0_2 = arith.constant 0 : index
    %2 = vector.load %arg2[%c0_1, %c0_2] : memref<512x512xbf16, #tpu.memory_space<vmem>>, vector<512x512xbf16>
    %cst = arith.constant dense<0.000000e+00> : vector<8x512xf32>
    %3 = tpu.matmul %1, %2, %cst {dimension_numbers = #tpu.dot_dimension_numbers<[1], [1], [0], [0], [0, 0, 1, 0], [], []>} : vector<8x512xbf16>, vector<512x512xbf16>, vector<8x512xf32> -> vector<8x512xf32>
    %c0_3 = arith.constant 0 : index
    %c0_4 = arith.constant 0 : index
    %4 = vector.load %arg3[%c0_3, %c0_4] : memref<1x512xf32, #tpu.memory_space<vmem>>, vector<1x512xf32>
    %5 = vector.broadcast %4 : vector<1x512xf32> to vector<8x512xf32>
    %6 = arith.addf %3, %5 : vector<8x512xf32>
    %7 = arith.truncf %6 : vector<8x512xf32> to vector<8x512xbf16>
    %c0_5 = arith.constant 0 : index
    %c0_6 = arith.constant 0 : index
    %8 = vector.load %arg4[%c0_5, %c0_6] : memref<512x512xbf16, #tpu.memory_space<vmem>>, vector<512x512xbf16>
    %cst_7 = arith.constant dense<0.000000e+00> : vector<8x512xf32>
    %9 = tpu.matmul %7, %8, %cst_7 {dimension_numbers = #tpu.dot_dimension_numbers<[1], [1], [0], [0], [0, 0, 1, 0], [], []>} : vector<8x512xbf16>, vector<512x512xbf16>, vector<8x512xf32> -> vector<8x512xf32>
    %c0_8 = arith.constant 0 : index
    %c0_9 = arith.constant 0 : index
    %10 = vector.load %arg5[%c0_8, %c0_9] : memref<1x512xf32, #tpu.memory_space<vmem>>, vector<1x512xf32>
    %11 = vector.broadcast %10 : vector<1x512xf32> to vector<8x512xf32>
    %12 = arith.addf %9, %11 : vector<8x512xf32>
    %c0_10 = arith.constant 0 : index
    %c0_11 = arith.constant 0 : index
    %13 = vector.load %arg6[%c0_10, %c0_11] : memref<8x512xf32, #tpu.memory_space<vmem>>, vector<8x512xf32>
    tpu.vector_store %arg6[%c0_10, %c0_11], %12 {strides = array<i32>} : memref<8x512xf32, #tpu.memory_space<vmem>>, vector<8x512xf32>,
    return
  }
  func.func @transform_0(%arg0: i32) -> (i32, i32) {
    %c0_i32 = arith.constant 0 : i32
    %c0_i32_0 = arith.constant 0 : i32
    return %arg0, %c0_i32 : i32, i32
  }
  func.func @transform_1(%arg0: i32) -> (i32, i32) {
    %c0_i32 = arith.constant 0 : i32
    %c0_i32_0 = arith.constant 0 : i32
    %c0_i32_1 = arith.constant 0 : i32
    return %c0_i32, %c0_i32_0 : i32, i32
  }
  func.func @transform_2(%arg0: i32) -> (i32, i32) {
    %c0_i32 = arith.constant 0 : i32
    %c0_i32_0 = arith.constant 0 : i32
    %c0_i32_1 = arith.constant 0 : i32
    return %c0_i32, %c0_i32_0 : i32, i32
  }
  func.func @transform_3(%arg0: i32) -> (i32, i32) {
    %c0_i32 = arith.constant 0 : i32
    %c0_i32_0 = arith.constant 0 : i32
    %c0_i32_1 = arith.constant 0 : i32
    return %c0_i32, %c0_i32_0 : i32, i32
  }
  func.func @transform_4(%arg0: i32) -> (i32, i32) {
    %c0_i32 = arith.constant 0 : i32
    %c0_i32_0 = arith.constant 0 : i32
    %c0_i32_1 = arith.constant 0 : i32
    return %c0_i32, %c0_i32_0 : i32, i32
  }
  func.func @transform_5(%arg0: i32) -> (i32, i32) {
    %c0_i32 = arith.constant 0 : i32
    %c0_i32_0 = arith.constant 0 : i32
    return %arg0, %c0_i32 : i32, i32
  }
}

</mosaic_0001>

<llo_original>
// kernel: tpu_custom_call.1
$region0: #{tpu_custom_call.1}
  #allocation0 [shape = 'u32[]', space=smem, size = 0x4, offset = 0x4, fixed_abs, tag = 'smem constant byte address 0x4 - core index']
  #allocation1 [shape = 'u32[144,128]{1,0:T(1,128)}', space=vmem, size = 0x12000, scoped, tag = 'internal scratch']
  %s0 = inlined_call_operand.hbm [shape: f32[8,512], index: 0, kind: input, shape index: {}]
  %s1 = inlined_call_operand.hbm [shape: bf16[512,512], index: 1, kind: input, shape index: {}]
  %s2 = inlined_call_operand.hbm [shape: f32[1,512], index: 2, kind: input, shape index: {}]
  %s3 = inlined_call_operand.hbm [shape: bf16[512,512], index: 3, kind: input, shape index: {}]
  %s4 = inlined_call_operand.vmem [shape: f32[1,512], index: 4, kind: input, shape index: {}]
  %s5 = inlined_call_operand.hbm [shape: f32[8,512], index: 5, kind: output, shape index: {}]
  %s6 = sld [smem:[#allocation0]]
  $region46: #{tpu_custom_call.1} parent=0
    _
  %s8 = ssub.s32 1, %s6
  %s9 = scalar_select 0, %s8, %s6
  $region1: #{tpu_custom_call.1} parent=0
    #allocation2 [shape = 'u8[16384]{0}', space=vmem, size = 0x4000, scoped, tag = 'input window, operand 0, single buffered']
    #allocation3 [shape = 's32[1]{0}', space=sflag, size = 0x4, scoped, tag = 'scoped memory for tpu_custom_call.1']
    #allocation4 [shape = 's32[1]{0}', space=sflag, size = 0x4, scoped, tag = 'scoped memory for tpu_custom_call.1']
    #allocation5 [shape = 'u8[524288]{0}', space=vmem, size = 0x80000, scoped, tag = 'input window, operand 1, single buffered']
    #allocation6 [shape = 's32[1]{0}', space=sflag, size = 0x4, scoped, tag = 'scoped memory for tpu_custom_call.1']
    #allocation7 [shape = 'u8[2048]{0}', space=vmem, size = 0x800, scoped, tag = 'input window, operand 2, single buffered']
    #allocation8 [shape = 'u8[524288]{0}', space=vmem, size = 0x80000, scoped, tag = 'input window, operand 3, single buffered']
    #allocation9 [shape = 's32[1]{0}', space=sflag, size = 0x4, scoped, tag = 'scoped memory for tpu_custom_call.1']
    #allocation10 [shape = 'u8[16384]{0}', space=vmem, size = 0x4000, scoped, tag = 'output window, operand 0, single buffered']
    %10 = vsyncpa [#allocation3], 0
    %11 = vsyncpa [#allocation6], 0
    %12 = vsyncpa [#allocation9], 0
    %13 = vsyncpa [#allocation4], 0
    // Predicated region
    $region2: #{tpu_custom_call.1} parent=1 // pred_check
      _
    $region3: #{tpu_custom_call.1} parent=1 // pred_check_branch
      %15 = sbr.rel (0) target = $region5
    $region4: #{tpu_custom_call.1} parent=1 // pred_region
      %s17 = ssub.s32 512, 512
      %18 = vsyncadd [#allocation3], %s17
      %s20 = sshll.u32 [#allocation2], 4
      %s21 = int_to_ptr.vmem [resolvable:$true] %s20
      %23 = dma.hbm_to_vmem [thread:$0]  %s0, 512, %s21, [#allocation3]
    $region5: #{tpu_custom_call.1} parent=1 // pred_fallthru
      _
    // Predicated region
    $region6: #{tpu_custom_call.1} parent=1 // pred_check
      _
    $region7: #{tpu_custom_call.1} parent=1 // pred_check_branch
      %25 = sbr.rel (0) target = $region9
    $region8: #{tpu_custom_call.1} parent=1 // pred_region
      %s27 = ssub.s32 16384, 16384
      %28 = vsyncadd [#allocation6], %s27
      %s29 = sshll.u32 [#allocation5], 4
      %s30 = int_to_ptr.vmem [resolvable:$true] %s29
      %35 = dma.hbm_to_vmem [thread:$0]  %s1, 16384, %s30, [#allocation6], 256, 256, 16
    $region9: #{tpu_custom_call.1} parent=1 // pred_fallthru
      _
    // Predicated region
    $region10: #{tpu_custom_call.1} parent=1 // pred_check
      _
    $region11: #{tpu_custom_call.1} parent=1 // pred_check_branch
      %37 = sbr.rel (0) target = $region13
    $region12: #{tpu_custom_call.1} parent=1 // pred_region
      %s39 = ssub.s32 64, 64
      %40 = vsyncadd [#allocation6], %s39
      %s42 = sshll.u32 [#allocation7], 4
      %s43 = int_to_ptr.vmem [resolvable:$true] %s42
      %45 = dma.hbm_to_vmem [thread:$0]  %s2, 64, %s43, [#allocation6]
    $region13: #{tpu_custom_call.1} parent=1 // pred_fallthru
      _
    // Predicated region
    $region14: #{tpu_custom_call.1} parent=1 // pred_check
      _
    $region15: #{tpu_custom_call.1} parent=1 // pred_check_branch
      %47 = sbr.rel (0) target = $region17
    $region16: #{tpu_custom_call.1} parent=1 // pred_region
      %s49 = ssub.s32 16384, 16384
      %50 = vsyncadd [#allocation9], %s49
      %s51 = sshll.u32 [#allocation8], 4
      %s52 = int_to_ptr.vmem [resolvable:$true] %s51
      %57 = dma.hbm_to_vmem [thread:$0]  %s3, 16384, %s52, [#allocation9], 256, 256, 16
    $region17: #{tpu_custom_call.1} parent=1 // pred_fallthru
      _
    // Predicated region
    $region18: #{tpu_custom_call.1} parent=1 // pred_check
      _
    $region19: #{tpu_custom_call.1} parent=1 // pred_check_branch
      %59 = sbr.rel (0) target = $region21
    $region20: #{tpu_custom_call.1} parent=1 // pred_region
      _
    $region21: #{tpu_custom_call.1} parent=1 // pred_fallthru
      _
    // Predicated region
    $region22: #{tpu_custom_call.1} parent=1 // pred_check
      _
    $region23: #{tpu_custom_call.1} parent=1 // pred_check_branch
      %61 = sbr.rel (0) target = $region25
    $region24: #{tpu_custom_call.1} parent=1 // pred_region
      %62 = dma.done [#allocation3], 512
    $region25: #{tpu_custom_call.1} parent=1 // pred_fallthru
      _
    // Predicated region
    $region26: #{tpu_custom_call.1} parent=1 // pred_check
      _
    $region27: #{tpu_custom_call.1} parent=1 // pred_check_branch
      %64 = sbr.rel (0) target = $region29
    $region28: #{tpu_custom_call.1} parent=1 // pred_region
      %65 = dma.done [#allocation6], 16384
    $region29: #{tpu_custom_call.1} parent=1 // pred_fallthru
      _
    // Predicated region
    $region30: #{tpu_custom_call.1} parent=1 // pred_check
      _
    $region31: #{tpu_custom_call.1} parent=1 // pred_check_branch
      %67 = sbr.rel (0) target = $region33
    $region32: #{tpu_custom_call.1} parent=1 // pred_region
      %68 = dma.done [#allocation6], 64
    $region33: #{tpu_custom_call.1} parent=1 // pred_fallthru
      _
    // Predicated region
    $region34: #{tpu_custom_call.1} parent=1 // pred_check
      _
    $region35: #{tpu_custom_call.1} parent=1 // pred_check_branch
      %70 = sbr.rel (0) target = $region37
    $region36: #{tpu_custom_call.1} parent=1 // pred_region
      %71 = dma.done [#allocation9], 16384
    $region37: #{tpu_custom_call.1} parent=1 // pred_fallthru
      _
    %v72 = vld [vmem:[#allocation2] sm:$0xff]
    %v73 = vld [vmem:[#allocation2 + $0x8] sm:$0xff]
    %v74 = vld [vmem:[#allocation2 + $0x10] sm:$0xff]
    %v75 = vld [vmem:[#allocation2 + $0x18] sm:$0xff]
    %v76 = vpack.c.bf16 %v72, %v72
    %v77 = vpack.c.bf16 %v73, %v73
    %v78 = vpack.c.bf16 %v74, %v74
    %v79 = vpack.c.bf16 %v75, %v75
    %v80 = vld [vmem:[#allocation5] sm:$0xff]
    %v81 = vld [vmem:[#allocation5 + $0x8] sm:$0xff]
    %v82 = vld [vmem:[#allocation5 + $0x10] sm:$0xff]
    %v83 = vld [vmem:[#allocation5 + $0x18] sm:$0xff]
    %v84 = vld [vmem:[#allocation5 + $0x20] sm:$0xff]
    %v85 = vld [vmem:[#allocation5 + $0x28] sm:$0xff]
    %v86 = vld [vmem:[#allocation5 + $0x30] sm:$0xff]
    %v87 = vld [vmem:[#allocation5 + $0x38] sm:$0xff]
    %v88 = vld [vmem:[#allocation5 + $0x40] sm:$0xff]
    %v89 = vld [vmem:[#allocation5 + $0x48] sm:$0xff]
    %v90 = vld [vmem:[#allocation5 + $0x50] sm:$0xff]
    %v91 = vld [vmem:[#allocation5 + $0x58] sm:$0xff]
    %v92 = vld [vmem:[#allocation5 + $0x60] sm:$0xff]
    %v93 = vld [vmem:[#allocation5 + $0x68] sm:$0xff]
    %v94 = vld [vmem:[#allocation5 + $0x70] sm:$0xff]
    %v95 = vld [vmem:[#allocation5 + $0x78] sm:$0xff]
    %v96 = vld [vmem:[#allocation5 + $0x80] sm:$0xff]
    %v97 = vld [vmem:[#allocation5 + $0x88] sm:$0xff]
    %v98 = vld [vmem:[#allocation5 + $0x90] sm:$0xff]
    %v99 = vld [vmem:[#allocation5 + $0x98] sm:$0xff]
    %v100 = vld [vmem:[#allocation5 + $0xa0] sm:$0xff]
    %v101 = vld [vmem:[#allocation5 + $0xa8] sm:$0xff]
    %v102 = vld [vmem:[#allocation5 + $0xb0] sm:$0xff]
    %v103 = vld [vmem:[#allocation5 + $0xb8] sm:$0xff]
    %v104 = vld [vmem:[#allocation5 + $0xc0] sm:$0xff]
    %v105 = vld [vmem:[#allocation5 + $0xc8] sm:$0xff]
    %v106 = vld [vmem:[#allocation5 + $0xd0] sm:$0xff]
    %v107 = vld [vmem:[#allocation5 + $0xd8] sm:$0xff]
    %v108 = vld [vmem:[#allocation5 + $0xe0] sm:$0xff]
    %v109 = vld [vmem:[#allocation5 + $0xe8] sm:$0xff]
    %v110 = vld [vmem:[#allocation5 + $0xf0] sm:$0xff]
    %v111 = vld [vmem:[#allocation5 + $0xf8] sm:$0xff]
    %v112 = vld [vmem:[#allocation5 + $0x100] sm:$0xff]
    %v113 = vld [vmem:[#allocation5 + $0x108] sm:$0xff]
    %v114 = vld [vmem:[#allocation5 + $0x110] sm:$0xff]
    %v115 = vld [vmem:[#allocation5 + $0x118] sm:$0xff]
    %v116 = vld [vmem:[#allocation5 + $0x120] sm:$0xff]
    %v117 = vld [vmem:[#allocation5 + $0x128] sm:$0xff]
    %v118 = vld [vmem:[#allocation5 + $0x130] sm:$0xff]
    %v119 = vld [vmem:[#allocation5 + $0x138] sm:$0xff]
    %v120 = vld [vmem:[#allocation5 + $0x140] sm:$0xff]
    %v121 = vld [vmem:[#allocation5 + $0x148] sm:$0xff]
    %v122 = vld [vmem:[#allocation5 + $0x150] sm:$0xff]
    %v123 = vld [vmem:[#allocation5 + $0x158] sm:$0xff]
    %v124 = vld [vmem:[#allocation5 + $0x160] sm:$0xff]
    %v125 = vld [vmem:[#allocation5 + $0x168] sm:$0xff]
    %v126 = vld [vmem:[#allocation5 + $0x170] sm:$0xff]
    %v127 = vld [vmem:[#allocation5 + $0x178] sm:$0xff]
    %v128 = vld [vmem:[#allocation5 + $0x180] sm:$0xff]
    %v129 = vld [vmem:[#allocation5 + $0x188] sm:$0xff]
    %v130 = vld [vmem:[#allocation5 + $0x190] sm:$0xff]
    %v131 = vld [vmem:[#allocation5 + $0x198] sm:$0xff]
    %v132 = vld [vmem:[#allocation5 + $0x1a0] sm:$0xff]
    %v133 = vld [vmem:[#allocation5 + $0x1a8] sm:$0xff]
    %v134 = vld [vmem:[#allocation5 + $0x1b0] sm:$0xff]
    %v135 = vld [vmem:[#allocation5 + $0x1b8] sm:$0xff]
    %v136 = vld [vmem:[#allocation5 + $0x1c0] sm:$0xff]
    %v137 = vld [vmem:[#allocation5 + $0x1c8] sm:$0xff]
    %v138 = vld [vmem:[#allocation5 + $0x1d0] sm:$0xff]
    %v139 = vld [vmem:[#allocation5 + $0x1d8] sm:$0xff]
    %v140 = vld [vmem:[#allocation5 + $0x1e0] sm:$0xff]
    %v141 = vld [vmem:[#allocation5 + $0x1e8] sm:$0xff]
    %v142 = vld [vmem:[#allocation5 + $0x1f0] sm:$0xff]
    %v143 = vld [vmem:[#allocation5 + $0x1f8] sm:$0xff]
    %v144 = vld [vmem:[#allocation5 + $0x200] sm:$0xff]
    %v145 = vld [vmem:[#allocation5 + $0x208] sm:$0xff]
    %v146 = vld [vmem:[#allocation5 + $0x210] sm:$0xff]
    %v147 = vld [vmem:[#allocation5 + $0x218] sm:$0xff]
    %v148 = vld [vmem:[#allocation5 + $0x220] sm:$0xff]
    %v149 = vld [vmem:[#allocation5 + $0x228] sm:$0xff]
    %v150 = vld [vmem:[#allocation5 + $0x230] sm:$0xff]
    %v151 = vld [vmem:[#allocation5 + $0x238] sm:$0xff]
    %v152 = vld [vmem:[#allocation5 + $0x240] sm:$0xff]
    %v153 = vld [vmem:[#allocation5 + $0x248] sm:$0xff]
    %v154 = vld [vmem:[#allocation5 + $0x250] sm:$0xff]
    %v155 = vld [vmem:[#allocation5 + $0x258] sm:$0xff]
    %v156 = vld [vmem:[#allocation5 + $0x260] sm:$0xff]
    %v157 = vld [vmem:[#allocation5 + $0x268] sm:$0xff]
    %v158 = vld [vmem:[#allocation5 + $0x270] sm:$0xff]
    %v159 = vld [vmem:[#allocation5 + $0x278] sm:$0xff]
    %v160 = vld [vmem:[#allocation5 + $0x280] sm:$0xff]
    %v161 = vld [vmem:[#allocation5 + $0x288] sm:$0xff]
    %v162 = vld [vmem:[#allocation5 + $0x290] sm:$0xff]
    %v163 = vld [vmem:[#allocation5 + $0x298] sm:$0xff]
    %v164 = vld [vmem:[#allocation5 + $0x2a0] sm:$0xff]
    %v165 = vld [vmem:[#allocation5 + $0x2a8] sm:$0xff]
    %v166 = vld [vmem:[#allocation5 + $0x2b0] sm:$0xff]
    %v167 = vld [vmem:[#allocation5 + $0x2b8] sm:$0xff]
    %v168 = vld [vmem:[#allocation5 + $0x2c0] sm:$0xff]
    %v169 = vld [vmem:[#allocation5 + $0x2c8] sm:$0xff]
    %v170 = vld [vmem:[#allocation5 + $0x2d0] sm:$0xff]
    %v171 = vld [vmem:[#allocation5 + $0x2d8] sm:$0xff]
    %v172 = vld [vmem:[#allocation5 + $0x2e0] sm:$0xff]
    %v173 = vld [vmem:[#allocation5 + $0x2e8] sm:$0xff]
    %v174 = vld [vmem:[#allocation5 + $0x2f0] sm:$0xff]
    %v175 = vld [vmem:[#allocation5 + $0x2f8] sm:$0xff]
    %v176 = vld [vmem:[#allocation5 + $0x300] sm:$0xff]
    %v177 = vld [vmem:[#allocation5 + $0x308] sm:$0xff]
    %v178 = vld [vmem:[#allocation5 + $0x310] sm:$0xff]
    %v179 = vld [vmem:[#allocation5 + $0x318] sm:$0xff]
    %v180 = vld [vmem:[#allocation5 + $0x320] sm:$0xff]
    %v181 = vld [vmem:[#allocation5 + $0x328] sm:$0xff]
    %v182 = vld [vmem:[#allocation5 + $0x330] sm:$0xff]
    %v183 = vld [vmem:[#allocation5 + $0x338] sm:$0xff]
    %v184 = vld [vmem:[#allocation5 + $0x340] sm:$0xff]
    %v185 = vld [vmem:[#allocation5 + $0x348] sm:$0xff]
    %v186 = vld [vmem:[#allocation5 + $0x350] sm:$0xff]
    %v187 = vld [vmem:[#allocation5 + $0x358] sm:$0xff]
    %v188 = vld [vmem:[#allocation5 + $0x360] sm:$0xff]
    %v189 = vld [vmem:[#allocation5 + $0x368] sm:$0xff]
    %v190 = vld [vmem:[#allocation5 + $0x370] sm:$0xff]
    %v191 = vld [vmem:[#allocation5 + $0x378] sm:$0xff]
    %v192 = vld [vmem:[#allocation5 + $0x380] sm:$0xff]
    %v193 = vld [vmem:[#allocation5 + $0x388] sm:$0xff]
    %v194 = vld [vmem:[#allocation5 + $0x390] sm:$0xff]
    %v195 = vld [vmem:[#allocation5 + $0x398] sm:$0xff]
    %v196 = vld [vmem:[#allocation5 + $0x3a0] sm:$0xff]
    %v197 = vld [vmem:[#allocation5 + $0x3a8] sm:$0xff]
    %v198 = vld [vmem:[#allocation5 + $0x3b0] sm:$0xff]
    %v199 = vld [vmem:[#allocation5 + $0x3b8] sm:$0xff]
    %v200 = vld [vmem:[#allocation5 + $0x3c0] sm:$0xff]
    %v201 = vld [vmem:[#allocation5 + $0x3c8] sm:$0xff]
    %v202 = vld [vmem:[#allocation5 + $0x3d0] sm:$0xff]
    %v203 = vld [vmem:[#allocation5 + $0x3d8] sm:$0xff]
    %v204 = vld [vmem:[#allocation5 + $0x3e0] sm:$0xff]
    %v205 = vld [vmem:[#allocation5 + $0x3e8] sm:$0xff]
    %v206 = vld [vmem:[#allocation5 + $0x3f0] sm:$0xff]
    %v207 = vld [vmem:[#allocation5 + $0x3f8] sm:$0xff]
    %v208 = vld [vmem:[#allocation7] sm:$0xf]
    %v210 = vlaneseq
    %v211 = vshrl.u32 %v210, 7
    %v212 = vsub.s32 0, %v211
    %v213 = vrot.slane %v208, %v212
    %v214 = vlaneseq
    %v215 = vshrl.u32 %v214, 7
    %v216 = vsub.s32 1, %v215
    %v217 = vrot.slane %v208, %v216
    %v218 = vlaneseq
    %v219 = vshrl.u32 %v218, 7
    %v220 = vsub.s32 2, %v219
    %v221 = vrot.slane %v208, %v220
    %v222 = vlaneseq
    %v223 = vshrl.u32 %v222, 7
    %v224 = vsub.s32 3, %v223
    %v225 = vrot.slane %v208, %v224
    %v358 = vunpack.c.l.b16 %v80
    %v359 = vunpack.c.h.b16 %v80
    %v360 = vunpack.c.l.b16 %v81
    %v361 = vunpack.c.h.b16 %v81
    %v362 = vunpack.c.l.b16 %v82
    %v363 = vunpack.c.h.b16 %v82
    %v364 = vunpack.c.l.b16 %v83
    %v365 = vunpack.c.h.b16 %v83
    %v366 = vunpack.c.l.b16 %v84
    %v367 = vunpack.c.h.b16 %v84
    %v368 = vunpack.c.l.b16 %v85
    %v369 = vunpack.c.h.b16 %v85
    %v370 = vunpack.c.l.b16 %v86
    %v371 = vunpack.c.h.b16 %v86
    %v372 = vunpack.c.l.b16 %v87
    %v373 = vunpack.c.h.b16 %v87
    %v374 = vunpack.c.l.b16 %v88
    %v375 = vunpack.c.h.b16 %v88
    %v376 = vunpack.c.l.b16 %v89
    %v377 = vunpack.c.h.b16 %v89
    %v378 = vunpack.c.l.b16 %v90
    %v379 = vunpack.c.h.b16 %v90
    %v380 = vunpack.c.l.b16 %v91
    %v381 = vunpack.c.h.b16 %v91
    %v382 = vunpack.c.l.b16 %v92
    %v383 = vunpack.c.h.b16 %v92
    %v384 = vunpack.c.l.b16 %v93
    %v385 = vunpack.c.h.b16 %v93
    %v386 = vunpack.c.l.b16 %v94
    %v387 = vunpack.c.h.b16 %v94
    %v388 = vunpack.c.l.b16 %v95
    %v389 = vunpack.c.h.b16 %v95
    %v390 = vunpack.c.l.b16 %v96
    %v391 = vunpack.c.h.b16 %v96
    %v392 = vunpack.c.l.b16 %v97
    %v393 = vunpack.c.h.b16 %v97
    %v394 = vunpack.c.l.b16 %v98
    %v395 = vunpack.c.h.b16 %v98
    %v396 = vunpack.c.l.b16 %v99
    %v397 = vunpack.c.h.b16 %v99
    %v398 = vunpack.c.l.b16 %v100
    %v399 = vunpack.c.h.b16 %v100
    %v400 = vunpack.c.l.b16 %v101
    %v401 = vunpack.c.h.b16 %v101
    %v402 = vunpack.c.l.b16 %v102
    %v403 = vunpack.c.h.b16 %v102
    %v404 = vunpack.c.l.b16 %v103
    %v405 = vunpack.c.h.b16 %v103
    %v406 = vunpack.c.l.b16 %v104
    %v407 = vunpack.c.h.b16 %v104
    %v408 = vunpack.c.l.b16 %v105
    %v409 = vunpack.c.h.b16 %v105
    %v410 = vunpack.c.l.b16 %v106
    %v411 = vunpack.c.h.b16 %v106
    %v412 = vunpack.c.l.b16 %v107
    %v413 = vunpack.c.h.b16 %v107
    %v414 = vunpack.c.l.b16 %v108
    %v415 = vunpack.c.h.b16 %v108
    %v416 = vunpack.c.l.b16 %v109
    %v417 = vunpack.c.h.b16 %v109
    %v418 = vunpack.c.l.b16 %v110
    %v419 = vunpack.c.h.b16 %v110
    %v420 = vunpack.c.l.b16 %v111
    %v421 = vunpack.c.h.b16 %v111
    %v422 = vunpack.c.l.b16 %v112
    %v423 = vunpack.c.h.b16 %v112
    %v424 = vunpack.c.l.b16 %v113
    %v425 = vunpack.c.h.b16 %v113
    %v426 = vunpack.c.l.b16 %v114
    %v427 = vunpack.c.h.b16 %v114
    %v428 = vunpack.c.l.b16 %v115
    %v429 = vunpack.c.h.b16 %v115
    %v430 = vunpack.c.l.b16 %v116
    %v431 = vunpack.c.h.b16 %v116
    %v432 = vunpack.c.l.b16 %v117
    %v433 = vunpack.c.h.b16 %v117
    %v434 = vunpack.c.l.b16 %v118
    %v435 = vunpack.c.h.b16 %v118
    %v436 = vunpack.c.l.b16 %v119
    %v437 = vunpack.c.h.b16 %v119
    %v438 = vunpack.c.l.b16 %v120
    %v439 = vunpack.c.h.b16 %v120
    %v440 = vunpack.c.l.b16 %v121
    %v441 = vunpack.c.h.b16 %v121
    %v442 = vunpack.c.l.b16 %v122
    %v443 = vunpack.c.h.b16 %v122
    %v444 = vunpack.c.l.b16 %v123
    %v445 = vunpack.c.h.b16 %v123
    %v446 = vunpack.c.l.b16 %v124
    %v447 = vunpack.c.h.b16 %v124
    %v448 = vunpack.c.l.b16 %v125
    %v449 = vunpack.c.h.b16 %v125
    %v450 = vunpack.c.l.b16 %v126
    %v451 = vunpack.c.h.b16 %v126
    %v452 = vunpack.c.l.b16 %v127
    %v453 = vunpack.c.h.b16 %v127
    %v454 = vunpack.c.l.b16 %v128
    %v455 = vunpack.c.h.b16 %v128
    %v456 = vunpack.c.l.b16 %v129
    %v457 = vunpack.c.h.b16 %v129
    %v458 = vunpack.c.l.b16 %v130
    %v459 = vunpack.c.h.b16 %v130
    %v460 = vunpack.c.l.b16 %v131
    %v461 = vunpack.c.h.b16 %v131
    %v462 = vunpack.c.l.b16 %v132
    %v463 = vunpack.c.h.b16 %v132
    %v464 = vunpack.c.l.b16 %v133
    %v465 = vunpack.c.h.b16 %v133
    %v466 = vunpack.c.l.b16 %v134
    %v467 = vunpack.c.h.b16 %v134
    %v468 = vunpack.c.l.b16 %v135
    %v469 = vunpack.c.h.b16 %v135
    %v470 = vunpack.c.l.b16 %v136
    %v471 = vunpack.c.h.b16 %v136
    %v472 = vunpack.c.l.b16 %v137
    %v473 = vunpack.c.h.b16 %v137
    %v474 = vunpack.c.l.b16 %v138
    %v475 = vunpack.c.h.b16 %v138
    %v476 = vunpack.c.l.b16 %v139
    %v477 = vunpack.c.h.b16 %v139
    %v478 = vunpack.c.l.b16 %v140
    %v479 = vunpack.c.h.b16 %v140
    %v480 = vunpack.c.l.b16 %v141
    %v481 = vunpack.c.h.b16 %v141
    %v482 = vunpack.c.l.b16 %v142
    %v483 = vunpack.c.h.b16 %v142
    %v484 = vunpack.c.l.b16 %v143
    %v485 = vunpack.c.h.b16 %v143
    %v486 = vunpack.c.l.b16 %v144
    %v487 = vunpack.c.h.b16 %v144
    %v488 = vunpack.c.l.b16 %v145
    %v489 = vunpack.c.h.b16 %v145
    %v490 = vunpack.c.l.b16 %v146
    %v491 = vunpack.c.h.b16 %v146
    %v492 = vunpack.c.l.b16 %v147
    %v493 = vunpack.c.h.b16 %v147
    %v494 = vunpack.c.l.b16 %v148
    %v495 = vunpack.c.h.b16 %v148
    %v496 = vunpack.c.l.b16 %v149
    %v497 = vunpack.c.h.b16 %v149
    %v498 = vunpack.c.l.b16 %v150
    %v499 = vunpack.c.h.b16 %v150
    %v500 = vunpack.c.l.b16 %v151
    %v501 = vunpack.c.h.b16 %v151
    %v502 = vunpack.c.l.b16 %v152
    %v503 = vunpack.c.h.b16 %v152
    %v504 = vunpack.c.l.b16 %v153
    %v505 = vunpack.c.h.b16 %v153
    %v506 = vunpack.c.l.b16 %v154
    %v507 = vunpack.c.h.b16 %v154
    %v508 = vunpack.c.l.b16 %v155
    %v509 = vunpack.c.h.b16 %v155
    %v510 = vunpack.c.l.b16 %v156
    %v511 = vunpack.c.h.b16 %v156
    %v512 = vunpack.c.l.b16 %v157
    %v513 = vunpack.c.h.b16 %v157
    %v514 = vunpack.c.l.b16 %v158
    %v515 = vunpack.c.h.b16 %v158
    %v516 = vunpack.c.l.b16 %v159
    %v517 = vunpack.c.h.b16 %v159
    %v518 = vunpack.c.l.b16 %v160
    %v519 = vunpack.c.h.b16 %v160
    %v520 = vunpack.c.l.b16 %v161
    %v521 = vunpack.c.h.b16 %v161
    %v522 = vunpack.c.l.b16 %v162
    %v523 = vunpack.c.h.b16 %v162
    %v524 = vunpack.c.l.b16 %v163
    %v525 = vunpack.c.h.b16 %v163
    %v526 = vunpack.c.l.b16 %v164
    %v527 = vunpack.c.h.b16 %v164
    %v528 = vunpack.c.l.b16 %v165
    %v529 = vunpack.c.h.b16 %v165
    %v530 = vunpack.c.l.b16 %v166
    %v531 = vunpack.c.h.b16 %v166
    %v532 = vunpack.c.l.b16 %v167
    %v533 = vunpack.c.h.b16 %v167
    %v534 = vunpack.c.l.b16 %v168
    %v535 = vunpack.c.h.b16 %v168
    %v536 = vunpack.c.l.b16 %v169
    %v537 = vunpack.c.h.b16 %v169
    %v538 = vunpack.c.l.b16 %v170
    %v539 = vunpack.c.h.b16 %v170
    %v540 = vunpack.c.l.b16 %v171
    %v541 = vunpack.c.h.b16 %v171
    %v542 = vunpack.c.l.b16 %v172
    %v543 = vunpack.c.h.b16 %v172
    %v544 = vunpack.c.l.b16 %v173
    %v545 = vunpack.c.h.b16 %v173
    %v546 = vunpack.c.l.b16 %v174
    %v547 = vunpack.c.h.b16 %v174
    %v548 = vunpack.c.l.b16 %v175
    %v549 = vunpack.c.h.b16 %v175
    %v550 = vunpack.c.l.b16 %v176
    %v551 = vunpack.c.h.b16 %v176
    %v552 = vunpack.c.l.b16 %v177
    %v553 = vunpack.c.h.b16 %v177
    %v554 = vunpack.c.l.b16 %v178
    %v555 = vunpack.c.h.b16 %v178
    %v556 = vunpack.c.l.b16 %v179
    %v557 = vunpack.c.h.b16 %v179
    %v558 = vunpack.c.l.b16 %v180
    %v559 = vunpack.c.h.b16 %v180
    %v560 = vunpack.c.l.b16 %v181
    %v561 = vunpack.c.h.b16 %v181
    %v562 = vunpack.c.l.b16 %v182
    %v563 = vunpack.c.h.b16 %v182
    %v564 = vunpack.c.l.b16 %v183
    %v565 = vunpack.c.h.b16 %v183
    %v566 = vunpack.c.l.b16 %v184
    %v567 = vunpack.c.h.b16 %v184
    %v568 = vunpack.c.l.b16 %v185
    %v569 = vunpack.c.h.b16 %v185
    %v570 = vunpack.c.l.b16 %v186
    %v571 = vunpack.c.h.b16 %v186
    %v572 = vunpack.c.l.b16 %v187
    %v573 = vunpack.c.h.b16 %v187
    %v574 = vunpack.c.l.b16 %v188
    %v575 = vunpack.c.h.b16 %v188
    %v576 = vunpack.c.l.b16 %v189
    %v577 = vunpack.c.h.b16 %v189
    %v578 = vunpack.c.l.b16 %v190
    %v579 = vunpack.c.h.b16 %v190
    %v580 = vunpack.c.l.b16 %v191
    %v581 = vunpack.c.h.b16 %v191
    %v582 = vunpack.c.l.b16 %v192
    %v583 = vunpack.c.h.b16 %v192
    %v584 = vunpack.c.l.b16 %v193
    %v585 = vunpack.c.h.b16 %v193
    %v586 = vunpack.c.l.b16 %v194
    %v587 = vunpack.c.h.b16 %v194
    %v588 = vunpack.c.l.b16 %v195
    %v589 = vunpack.c.h.b16 %v195
    %v590 = vunpack.c.l.b16 %v196
    %v591 = vunpack.c.h.b16 %v196
    %v592 = vunpack.c.l.b16 %v197
    %v593 = vunpack.c.h.b16 %v197
    %v594 = vunpack.c.l.b16 %v198
    %v595 = vunpack.c.h.b16 %v198
    %v596 = vunpack.c.l.b16 %v199
    %v597 = vunpack.c.h.b16 %v199
    %v598 = vunpack.c.l.b16 %v200
    %v599 = vunpack.c.h.b16 %v200
    %v600 = vunpack.c.l.b16 %v201
    %v601 = vunpack.c.h.b16 %v201
    %v602 = vunpack.c.l.b16 %v202
    %v603 = vunpack.c.h.b16 %v202
    %v604 = vunpack.c.l.b16 %v203
    %v605 = vunpack.c.h.b16 %v203
    %v606 = vunpack.c.l.b16 %v204
    %v607 = vunpack.c.h.b16 %v204
    %v608 = vunpack.c.l.b16 %v205
    %v609 = vunpack.c.h.b16 %v205
    %v610 = vunpack.c.l.b16 %v206
    %v611 = vunpack.c.h.b16 %v206
    %v612 = vunpack.c.l.b16 %v207
    %v613 = vunpack.c.h.b16 %v207
    %v614 = vpack.c.b16 %v362, %v358
    %v615 = vpack.c.b16 %v363, %v359
    %v616 = vpack.c.b16 %v364, %v360
    %v617 = vpack.c.b16 %v365, %v361
    %v618 = vpack.c.b16 %v370, %v366
    %v619 = vpack.c.b16 %v371, %v367
    %v620 = vpack.c.b16 %v372, %v368
    %v621 = vpack.c.b16 %v373, %v369
    %v622 = vpack.c.b16 %v378, %v374
    %v623 = vpack.c.b16 %v379, %v375
    %v624 = vpack.c.b16 %v380, %v376
    %v625 = vpack.c.b16 %v381, %v377
    %v626 = vpack.c.b16 %v386, %v382
    %v627 = vpack.c.b16 %v387, %v383
    %v628 = vpack.c.b16 %v388, %v384
    %v629 = vpack.c.b16 %v389, %v385
    %v630 = vpack.c.b16 %v394, %v390
    %v631 = vpack.c.b16 %v395, %v391
    %v632 = vpack.c.b16 %v396, %v392
    %v633 = vpack.c.b16 %v397, %v393
    %v634 = vpack.c.b16 %v402, %v398
    %v635 = vpack.c.b16 %v403, %v399
    %v636 = vpack.c.b16 %v404, %v400
    %v637 = vpack.c.b16 %v405, %v401
    %v638 = vpack.c.b16 %v410, %v406
    %v639 = vpack.c.b16 %v411, %v407
    %v640 = vpack.c.b16 %v412, %v408
    %v641 = vpack.c.b16 %v413, %v409
    %v642 = vpack.c.b16 %v418, %v414
    %v643 = vpack.c.b16 %v419, %v415
    %v644 = vpack.c.b16 %v420, %v416
    %v645 = vpack.c.b16 %v421, %v417
    %v646 = vpack.c.b16 %v426, %v422
    %v647 = vpack.c.b16 %v427, %v423
    %v648 = vpack.c.b16 %v428, %v424
    %v649 = vpack.c.b16 %v429, %v425
    %v650 = vpack.c.b16 %v434, %v430
    %v651 = vpack.c.b16 %v435, %v431
    %v652 = vpack.c.b16 %v436, %v432
    %v653 = vpack.c.b16 %v437, %v433
    %v654 = vpack.c.b16 %v442, %v438
    %v655 = vpack.c.b16 %v443, %v439
    %v656 = vpack.c.b16 %v444, %v440
    %v657 = vpack.c.b16 %v445, %v441
    %v658 = vpack.c.b16 %v450, %v446
    %v659 = vpack.c.b16 %v451, %v447
    %v660 = vpack.c.b16 %v452, %v448
    %v661 = vpack.c.b16 %v453, %v449
    %v662 = vpack.c.b16 %v458, %v454
    %v663 = vpack.c.b16 %v459, %v455
    %v664 = vpack.c.b16 %v460, %v456
    %v665 = vpack.c.b16 %v461, %v457
    %v666 = vpack.c.b16 %v466, %v462
    %v667 = vpack.c.b16 %v467, %v463
    %v668 = vpack.c.b16 %v468, %v464
    %v669 = vpack.c.b16 %v469, %v465
    %v670 = vpack.c.b16 %v474, %v470
    %v671 = vpack.c.b16 %v475, %v471
    %v672 = vpack.c.b16 %v476, %v472
    %v673 = vpack.c.b16 %v477, %v473
    %v674 = vpack.c.b16 %v482, %v478
    %v675 = vpack.c.b16 %v483, %v479
    %v676 = vpack.c.b16 %v484, %v480
    %v677 = vpack.c.b16 %v485, %v481
    %v678 = vpack.c.b16 %v490, %v486
    %v679 = vpack.c.b16 %v491, %v487
    %v680 = vpack.c.b16 %v492, %v488
    %v681 = vpack.c.b16 %v493, %v489
    %v682 = vpack.c.b16 %v498, %v494
    %v683 = vpack.c.b16 %v499, %v495
    %v684 = vpack.c.b16 %v500, %v496
    %v685 = vpack.c.b16 %v501, %v497
    %v686 = vpack.c.b16 %v506, %v502
    %v687 = vpack.c.b16 %v507, %v503
    %v688 = vpack.c.b16 %v508, %v504
    %v689 = vpack.c.b16 %v509, %v505
    %v690 = vpack.c.b16 %v514, %v510
    %v691 = vpack.c.b16 %v515, %v511
    %v692 = vpack.c.b16 %v516, %v512
    %v693 = vpack.c.b16 %v517, %v513
    %v694 = vpack.c.b16 %v522, %v518
    %v695 = vpack.c.b16 %v523, %v519
    %v696 = vpack.c.b16 %v524, %v520
    %v697 = vpack.c.b16 %v525, %v521
    %v698 = vpack.c.b16 %v530, %v526
    %v699 = vpack.c.b16 %v531, %v527
    %v700 = vpack.c.b16 %v532, %v528
    %v701 = vpack.c.b16 %v533, %v529
    %v702 = vpack.c.b16 %v538, %v534
    %v703 = vpack.c.b16 %v539, %v535
    %v704 = vpack.c.b16 %v540, %v536
    %v705 = vpack.c.b16 %v541, %v537
    %v706 = vpack.c.b16 %v546, %v542
    %v707 = vpack.c.b16 %v547, %v543
    %v708 = vpack.c.b16 %v548, %v544
    %v709 = vpack.c.b16 %v549, %v545
    %v710 = vpack.c.b16 %v554, %v550
    %v711 = vpack.c.b16 %v555, %v551
    %v712 = vpack.c.b16 %v556, %v552
    %v713 = vpack.c.b16 %v557, %v553
    %v714 = vpack.c.b16 %v562, %v558
    %v715 = vpack.c.b16 %v563, %v559
    %v716 = vpack.c.b16 %v564, %v560
    %v717 = vpack.c.b16 %v565, %v561
    %v718 = vpack.c.b16 %v570, %v566
    %v719 = vpack.c.b16 %v571, %v567
    %v720 = vpack.c.b16 %v572, %v568
    %v721 = vpack.c.b16 %v573, %v569
    %v722 = vpack.c.b16 %v578, %v574
    %v723 = vpack.c.b16 %v579, %v575
    %v724 = vpack.c.b16 %v580, %v576
    %v725 = vpack.c.b16 %v581, %v577
    %v726 = vpack.c.b16 %v586, %v582
    %v727 = vpack.c.b16 %v587, %v583
    %v728 = vpack.c.b16 %v588, %v584
    %v729 = vpack.c.b16 %v589, %v585
    %v730 = vpack.c.b16 %v594, %v590
    %v731 = vpack.c.b16 %v595, %v591
    %v732 = vpack.c.b16 %v596, %v592
    %v733 = vpack.c.b16 %v597, %v593
    %v734 = vpack.c.b16 %v602, %v598
    %v735 = vpack.c.b16 %v603, %v599
    %v736 = vpack.c.b16 %v604, %v600
    %v737 = vpack.c.b16 %v605, %v601
    %v738 = vpack.c.b16 %v610, %v606
    %v739 = vpack.c.b16 %v611, %v607
    %v740 = vpack.c.b16 %v612, %v608
    %v741 = vpack.c.b16 %v613, %v609
    %870 = vmatprep.subr.bf16.mxu0 %v643
    %871 = vmatpush1.bf16.xpose.msra.mxu0 %v642
    %872 = vmatprep.subr.bf16.mxu0 %v639
    %873 = vmatpush1.bf16.xpose.msra.mxu0 %v638
    %874 = vmatprep.subr.bf16.mxu0 %v635
    %875 = vmatpush1.bf16.xpose.msra.mxu0 %v634
    %876 = vmatprep.subr.bf16.mxu0 %v631
    %877 = vmatpush1.bf16.xpose.msra.mxu0 %v630
    %878 = vmatprep.subr.bf16.mxu0 %v627
    %879 = vmatpush1.bf16.xpose.msra.mxu0 %v626
    %880 = vmatprep.subr.bf16.mxu0 %v623
    %881 = vmatpush1.bf16.xpose.msra.mxu0 %v622
    %882 = vmatprep.subr.bf16.mxu0 %v619
    %883 = vmatpush1.bf16.xpose.msra.mxu0 %v618
    %884 = vmatprep.subr.bf16.mxu0 %v615
    %885 = vmatpush1.bf16.xpose.msra.mxu0 %v614
    %886 = vmatprep.subr.bf16.mxu0 %v675
    %887 = vmatpush2.bf16.xpose.msra.mxu0 %v674
    %888 = vmatprep.subr.bf16.mxu0 %v671
    %889 = vmatpush2.bf16.xpose.msra.mxu0 %v670
    %890 = vmatprep.subr.bf16.mxu0 %v667
    %891 = vmatpush2.bf16.xpose.msra.mxu0 %v666
    %892 = vmatprep.subr.bf16.mxu0 %v663
    %893 = vmatpush2.bf16.xpose.msra.mxu0 %v662
    %894 = vmatprep.subr.bf16.mxu0 %v659
    %895 = vmatpush2.bf16.xpose.msra.mxu0 %v658
    %896 = vmatprep.subr.bf16.mxu0 %v655
    %897 = vmatpush2.bf16.xpose.msra.mxu0 %v654
    %898 = vmatprep.subr.bf16.mxu0 %v651
    %899 = vmatpush2.bf16.xpose.msra.mxu0 %v650
    %900 = vmatprep.subr.bf16.mxu0 %v647
    %901 = vmatpush2.bf16.xpose.msra.mxu0 %v646
    %902 = vmatprep.mubr.bf16.mxu0 %v77
    %903 = vmatmul.mubr.bf16.gmra.mxu0 %v76
    %v904 = vpop.f32.mrf.mxu0
    %v905 = vadd.f32 %v213, %v904
    %v906 = vpop.f32.mrf.mxu0
    %v907 = vadd.f32 %v217, %v906
    %v908 = vpop.f32.mrf.mxu0
    %v909 = vpop.f32.mrf.mxu0
    %910 = vdwg.mxu0
    %911 = vmatprep.subr.bf16.mxu0 %v645
    %912 = vmatpush1.bf16.xpose.msra.mxu0 %v644
    %913 = vmatprep.subr.bf16.mxu0 %v641
    %914 = vmatpush1.bf16.xpose.msra.mxu0 %v640
    %915 = vmatprep.subr.bf16.mxu0 %v637
    %916 = vmatpush1.bf16.xpose.msra.mxu0 %v636
    %917 = vmatprep.subr.bf16.mxu0 %v633
    %918 = vmatpush1.bf16.xpose.msra.mxu0 %v632
    %919 = vmatprep.subr.bf16.mxu0 %v629
    %920 = vmatpush1.bf16.xpose.msra.mxu0 %v628
    %921 = vmatprep.subr.bf16.mxu0 %v625
    %922 = vmatpush1.bf16.xpose.msra.mxu0 %v624
    %923 = vmatprep.subr.bf16.mxu0 %v621
    %924 = vmatpush1.bf16.xpose.msra.mxu0 %v620
    %925 = vmatprep.subr.bf16.mxu0 %v617
    %926 = vmatpush1.bf16.xpose.msra.mxu0 %v616
    %927 = vmatprep.subr.bf16.mxu0 %v677
    %928 = vmatpush2.bf16.xpose.msra.mxu0 %v676
    %929 = vmatprep.subr.bf16.mxu0 %v673
    %930 = vmatpush2.bf16.xpose.msra.mxu0 %v672
    %931 = vmatprep.subr.bf16.mxu0 %v669
    %932 = vmatpush2.bf16.xpose.msra.mxu0 %v668
    %933 = vmatprep.subr.bf16.mxu0 %v665
    %934 = vmatpush2.bf16.xpose.msra.mxu0 %v664
    %935 = vmatprep.subr.bf16.mxu0 %v661
    %936 = vmatpush2.bf16.xpose.msra.mxu0 %v660
    %937 = vmatprep.subr.bf16.mxu0 %v657
    %938 = vmatpush2.bf16.xpose.msra.mxu0 %v656
    %939 = vmatprep.subr.bf16.mxu0 %v653
    %940 = vmatpush2.bf16.xpose.msra.mxu0 %v652
    %941 = vmatprep.subr.bf16.mxu0 %v649
    %942 = vmatpush2.bf16.xpose.msra.mxu0 %v648
    %943 = vmatprep.mubr.bf16.mxu0 %v79
    %944 = vmatmul.mubr.bf16.gmra.mxu0 %v78
    %v945 = vpop.f32.mrf.mxu0
    %v946 = vadd.f32 %v905, %v945
    %v947 = vpop.f32.mrf.mxu0
    %v948 = vadd.f32 %v907, %v947
    %v949 = vpop.f32.mrf.mxu0
    %v950 = vpop.f32.mrf.mxu0
    %951 = vdwg.mxu0
    %952 = vmatprep.subr.bf16.mxu0 %v707
    %953 = vmatpush1.bf16.xpose.msra.mxu0 %v706
    %954 = vmatprep.subr.bf16.mxu0 %v703
    %955 = vmatpush1.bf16.xpose.msra.mxu0 %v702
    %956 = vmatprep.subr.bf16.mxu0 %v699
    %957 = vmatpush1.bf16.xpose.msra.mxu0 %v698
    %958 = vmatprep.subr.bf16.mxu0 %v695
    %959 = vmatpush1.bf16.xpose.msra.mxu0 %v694
    %960 = vmatprep.subr.bf16.mxu0 %v691
    %961 = vmatpush1.bf16.xpose.msra.mxu0 %v690
    %962 = vmatprep.subr.bf16.mxu0 %v687
    %963 = vmatpush1.bf16.xpose.msra.mxu0 %v686
    %964 = vmatprep.subr.bf16.mxu0 %v683
    %965 = vmatpush1.bf16.xpose.msra.mxu0 %v682
    %966 = vmatprep.subr.bf16.mxu0 %v679
    %967 = vmatpush1.bf16.xpose.msra.mxu0 %v678
    %968 = vmatprep.subr.bf16.mxu0 %v739
    %969 = vmatpush2.bf16.xpose.msra.mxu0 %v738
    %970 = vmatprep.subr.bf16.mxu0 %v735
    %971 = vmatpush2.bf16.xpose.msra.mxu0 %v734
    %972 = vmatprep.subr.bf16.mxu0 %v731
    %973 = vmatpush2.bf16.xpose.msra.mxu0 %v730
    %974 = vmatprep.subr.bf16.mxu0 %v727
    %975 = vmatpush2.bf16.xpose.msra.mxu0 %v726
    %976 = vmatprep.subr.bf16.mxu0 %v723
    %977 = vmatpush2.bf16.xpose.msra.mxu0 %v722
    %978 = vmatprep.subr.bf16.mxu0 %v719
    %979 = vmatpush2.bf16.xpose.msra.mxu0 %v718
    %980 = vmatprep.subr.bf16.mxu0 %v715
    %981 = vmatpush2.bf16.xpose.msra.mxu0 %v714
    %982 = vmatprep.subr.bf16.mxu0 %v711
    %983 = vmatpush2.bf16.xpose.msra.mxu0 %v710
    %984 = vmatprep.mubr.bf16.mxu0 %v77
    %985 = vmatmul.mubr.bf16.gmra.mxu0 %v76
    %v986 = vpop.f32.mrf.mxu0
    %v987 = vadd.f32 %v221, %v986
    %v988 = vpop.f32.mrf.mxu0
    %v989 = vadd.f32 %v225, %v988
    %v990 = vpop.f32.mrf.mxu0
    %v991 = vpop.f32.mrf.mxu0
    %992 = vdwg.mxu0
    %993 = vmatprep.subr.bf16.mxu0 %v709
    %994 = vmatpush1.bf16.xpose.msra.mxu0 %v708
    %995 = vmatprep.subr.bf16.mxu0 %v705
    %996 = vmatpush1.bf16.xpose.msra.mxu0 %v704
    %997 = vmatprep.subr.bf16.mxu0 %v701
    %998 = vmatpush1.bf16.xpose.msra.mxu0 %v700
    %999 = vmatprep.subr.bf16.mxu0 %v697
    %1000 = vmatpush1.bf16.xpose.msra.mxu0 %v696
    %1001 = vmatprep.subr.bf16.mxu0 %v693
    %1002 = vmatpush1.bf16.xpose.msra.mxu0 %v692
    %1003 = vmatprep.subr.bf16.mxu0 %v689
    %1004 = vmatpush1.bf16.xpose.msra.mxu0 %v688
    %1005 = vmatprep.subr.bf16.mxu0 %v685
    %1006 = vmatpush1.bf16.xpose.msra.mxu0 %v684
    %1007 = vmatprep.subr.bf16.mxu0 %v681
    %1008 = vmatpush1.bf16.xpose.msra.mxu0 %v680
    %1009 = vmatprep.subr.bf16.mxu0 %v741
    %1010 = vmatpush2.bf16.xpose.msra.mxu0 %v740
    %1011 = vmatprep.subr.bf16.mxu0 %v737
    %1012 = vmatpush2.bf16.xpose.msra.mxu0 %v736
    %1013 = vmatprep.subr.bf16.mxu0 %v733
    %1014 = vmatpush2.bf16.xpose.msra.mxu0 %v732
    %1015 = vmatprep.subr.bf16.mxu0 %v729
    %1016 = vmatpush2.bf16.xpose.msra.mxu0 %v728
    %1017 = vmatprep.subr.bf16.mxu0 %v725
    %1018 = vmatpush2.bf16.xpose.msra.mxu0 %v724
    %1019 = vmatprep.subr.bf16.mxu0 %v721
    %1020 = vmatpush2.bf16.xpose.msra.mxu0 %v720
    %1021 = vmatprep.subr.bf16.mxu0 %v717
    %1022 = vmatpush2.bf16.xpose.msra.mxu0 %v716
    %1023 = vmatprep.subr.bf16.mxu0 %v713
    %1024 = vmatpush2.bf16.xpose.msra.mxu0 %v712
    %1025 = vmatprep.mubr.bf16.mxu0 %v79
    %1026 = vmatmul.mubr.bf16.gmra.mxu0 %v78
    %v1027 = vpop.f32.mrf.mxu0
    %v1028 = vadd.f32 %v987, %v1027
    %v1029 = vpop.f32.mrf.mxu0
    %v1030 = vadd.f32 %v989, %v1029
    %v1031 = vpop.f32.mrf.mxu0
    %v1032 = vpop.f32.mrf.mxu0
    %1033 = vdwg.mxu0
    %v1034 = vpack.c.bf16 %v946, %v946
    %v1035 = vpack.c.bf16 %v948, %v948
    %v1036 = vpack.c.bf16 %v1028, %v1028
    %v1037 = vpack.c.bf16 %v1030, %v1030
    %v1038 = vld [vmem:[#allocation8] sm:$0xff]
    %v1039 = vld [vmem:[#allocation8 + $0x8] sm:$0xff]
    %v1040 = vld [vmem:[#allocation8 + $0x10] sm:$0xff]
    %v1041 = vld [vmem:[#allocation8 + $0x18] sm:$0xff]
    %v1042 = vld [vmem:[#allocation8 + $0x20] sm:$0xff]
    %v1043 = vld [vmem:[#allocation8 + $0x28] sm:$0xff]
    %v1044 = vld [vmem:[#allocation8 + $0x30] sm:$0xff]
    %v1045 = vld [vmem:[#allocation8 + $0x38] sm:$0xff]
    %v1046 = vld [vmem:[#allocation8 + $0x40] sm:$0xff]
    %v1047 = vld [vmem:[#allocation8 + $0x48] sm:$0xff]
    %v1048 = vld [vmem:[#allocation8 + $0x50] sm:$0xff]
    %v1049 = vld [vmem:[#allocation8 + $0x58] sm:$0xff]
    %v1050 = vld [vmem:[#allocation8 + $0x60] sm:$0xff]
    %v1051 = vld [vmem:[#allocation8 + $0x68] sm:$0xff]
    %v1052 = vld [vmem:[#allocation8 + $0x70] sm:$0xff]
    %v1053 = vld [vmem:[#allocation8 + $0x78] sm:$0xff]
    %v1054 = vld [vmem:[#allocation8 + $0x80] sm:$0xff]
    %v1055 = vld [vmem:[#allocation8 + $0x88] sm:$0xff]
    %v1056 = vld [vmem:[#allocation8 + $0x90] sm:$0xff]
    %v1057 = vld [vmem:[#allocation8 + $0x98] sm:$0xff]
    %v1058 = vld [vmem:[#allocation8 + $0xa0] sm:$0xff]
    %v1059 = vld [vmem:[#allocation8 + $0xa8] sm:$0xff]
    %v1060 = vld [vmem:[#allocation8 + $0xb0] sm:$0xff]
    %v1061 = vld [vmem:[#allocation8 + $0xb8] sm:$0xff]
    %v1062 = vld [vmem:[#allocation8 + $0xc0] sm:$0xff]
    %v1063 = vld [vmem:[#allocation8 + $0xc8] sm:$0xff]
    %v1064 = vld [vmem:[#allocation8 + $0xd0] sm:$0xff]
    %v1065 = vld [vmem:[#allocation8 + $0xd8] sm:$0xff]
    %v1066 = vld [vmem:[#allocation8 + $0xe0] sm:$0xff]
    %v1067 = vld [vmem:[#allocation8 + $0xe8] sm:$0xff]
    %v1068 = vld [vmem:[#allocation8 + $0xf0] sm:$0xff]
    %v1069 = vld [vmem:[#allocation8 + $0xf8] sm:$0xff]
    %v1070 = vld [vmem:[#allocation8 + $0x100] sm:$0xff]
    %v1071 = vld [vmem:[#allocation8 + $0x108] sm:$0xff]
    %v1072 = vld [vmem:[#allocation8 + $0x110] sm:$0xff]
    %v1073 = vld [vmem:[#allocation8 + $0x118] sm:$0xff]
    %v1074 = vld [vmem:[#allocation8 + $0x120] sm:$0xff]
    %v1075 = vld [vmem:[#allocation8 + $0x128] sm:$0xff]
    %v1076 = vld [vmem:[#allocation8 + $0x130] sm:$0xff]
    %v1077 = vld [vmem:[#allocation8 + $0x138] sm:$0xff]
    %v1078 = vld [vmem:[#allocation8 + $0x140] sm:$0xff]
    %v1079 = vld [vmem:[#allocation8 + $0x148] sm:$0xff]
    %v1080 = vld [vmem:[#allocation8 + $0x150] sm:$0xff]
    %v1081 = vld [vmem:[#allocation8 + $0x158] sm:$0xff]
    %v1082 = vld [vmem:[#allocation8 + $0x160] sm:$0xff]
    %v1083 = vld [vmem:[#allocation8 + $0x168] sm:$0xff]
    %v1084 = vld [vmem:[#allocation8 + $0x170] sm:$0xff]
    %v1085 = vld [vmem:[#allocation8 + $0x178] sm:$0xff]
    %v1086 = vld [vmem:[#allocation8 + $0x180] sm:$0xff]
    %v1087 = vld [vmem:[#allocation8 + $0x188] sm:$0xff]
    %v1088 = vld [vmem:[#allocation8 + $0x190] sm:$0xff]
    %v1089 = vld [vmem:[#allocation8 + $0x198] sm:$0xff]
    %v1090 = vld [vmem:[#allocation8 + $0x1a0] sm:$0xff]
    %v1091 = vld [vmem:[#allocation8 + $0x1a8] sm:$0xff]
    %v1092 = vld [vmem:[#allocation8 + $0x1b0] sm:$0xff]
    %v1093 = vld [vmem:[#allocation8 + $0x1b8] sm:$0xff]
    %v1094 = vld [vmem:[#allocation8 + $0x1c0] sm:$0xff]
    %v1095 = vld [vmem:[#allocation8 + $0x1c8] sm:$0xff]
    %v1096 = vld [vmem:[#allocation8 + $0x1d0] sm:$0xff]
    %v1097 = vld [vmem:[#allocation8 + $0x1d8] sm:$0xff]
    %v1098 = vld [vmem:[#allocation8 + $0x1e0] sm:$0xff]
    %v1099 = vld [vmem:[#allocation8 + $0x1e8] sm:$0xff]
    %v1100 = vld [vmem:[#allocation8 + $0x1f0] sm:$0xff]
    %v1101 = vld [vmem:[#allocation8 + $0x1f8] sm:$0xff]
    %v1102 = vld [vmem:[#allocation8 + $0x200] sm:$0xff]
    %v1103 = vld [vmem:[#allocation8 + $0x208] sm:$0xff]
    %v1104 = vld [vmem:[#allocation8 + $0x210] sm:$0xff]
    %v1105 = vld [vmem:[#allocation8 + $0x218] sm:$0xff]
    %v1106 = vld [vmem:[#allocation8 + $0x220] sm:$0xff]
    %v1107 = vld [vmem:[#allocation8 + $0x228] sm:$0xff]
    %v1108 = vld [vmem:[#allocation8 + $0x230] sm:$0xff]
    %v1109 = vld [vmem:[#allocation8 + $0x238] sm:$0xff]
    %v1110 = vld [vmem:[#allocation8 + $0x240] sm:$0xff]
    %v1111 = vld [vmem:[#allocation8 + $0x248] sm:$0xff]
    %v1112 = vld [vmem:[#allocation8 + $0x250] sm:$0xff]
    %v1113 = vld [vmem:[#allocation8 + $0x258] sm:$0xff]
    %v1114 = vld [vmem:[#allocation8 + $0x260] sm:$0xff]
    %v1115 = vld [vmem:[#allocation8 + $0x268] sm:$0xff]
    %v1116 = vld [vmem:[#allocation8 + $0x270] sm:$0xff]
    %v1117 = vld [vmem:[#allocation8 + $0x278] sm:$0xff]
    %v1118 = vld [vmem:[#allocation8 + $0x280] sm:$0xff]
    %v1119 = vld [vmem:[#allocation8 + $0x288] sm:$0xff]
    %v1120 = vld [vmem:[#allocation8 + $0x290] sm:$0xff]
    %v1121 = vld [vmem:[#allocation8 + $0x298] sm:$0xff]
    %v1122 = vld [vmem:[#allocation8 + $0x2a0] sm:$0xff]
    %v1123 = vld [vmem:[#allocation8 + $0x2a8] sm:$0xff]
    %v1124 = vld [vmem:[#allocation8 + $0x2b0] sm:$0xff]
    %v1125 = vld [vmem:[#allocation8 + $0x2b8] sm:$0xff]
    %v1126 = vld [vmem:[#allocation8 + $0x2c0] sm:$0xff]
    %v1127 = vld [vmem:[#allocation8 + $0x2c8] sm:$0xff]
    %v1128 = vld [vmem:[#allocation8 + $0x2d0] sm:$0xff]
    %v1129 = vld [vmem:[#allocation8 + $0x2d8] sm:$0xff]
    %v1130 = vld [vmem:[#allocation8 + $0x2e0] sm:$0xff]
    %v1131 = vld [vmem:[#allocation8 + $0x2e8] sm:$0xff]
    %v1132 = vld [vmem:[#allocation8 + $0x2f0] sm:$0xff]
    %v1133 = vld [vmem:[#allocation8 + $0x2f8] sm:$0xff]
    %v1134 = vld [vmem:[#allocation8 + $0x300] sm:$0xff]
    %v1135 = vld [vmem:[#allocation8 + $0x308] sm:$0xff]
    %v1136 = vld [vmem:[#allocation8 + $0x310] sm:$0xff]
    %v1137 = vld [vmem:[#allocation8 + $0x318] sm:$0xff]
    %v1138 = vld [vmem:[#allocation8 + $0x320] sm:$0xff]
    %v1139 = vld [vmem:[#allocation8 + $0x328] sm:$0xff]
    %v1140 = vld [vmem:[#allocation8 + $0x330] sm:$0xff]
    %v1141 = vld [vmem:[#allocation8 + $0x338] sm:$0xff]
    %v1142 = vld [vmem:[#allocation8 + $0x340] sm:$0xff]
    %v1143 = vld [vmem:[#allocation8 + $0x348] sm:$0xff]
    %v1144 = vld [vmem:[#allocation8 + $0x350] sm:$0xff]
    %v1145 = vld [vmem:[#allocation8 + $0x358] sm:$0xff]
    %v1146 = vld [vmem:[#allocation8 + $0x360] sm:$0xff]
    %v1147 = vld [vmem:[#allocation8 + $0x368] sm:$0xff]
    %v1148 = vld [vmem:[#allocation8 + $0x370] sm:$0xff]
    %v1149 = vld [vmem:[#allocation8 + $0x378] sm:$0xff]
    %v1150 = vld [vmem:[#allocation8 + $0x380] sm:$0xff]
    %v1151 = vld [vmem:[#allocation8 + $0x388] sm:$0xff]
    %v1152 = vld [vmem:[#allocation8 + $0x390] sm:$0xff]
    %v1153 = vld [vmem:[#allocation8 + $0x398] sm:$0xff]
    %v1154 = vld [vmem:[#allocation8 + $0x3a0] sm:$0xff]
    %v1155 = vld [vmem:[#allocation8 + $0x3a8] sm:$0xff]
    %v1156 = vld [vmem:[#allocation8 + $0x3b0] sm:$0xff]
    %v1157 = vld [vmem:[#allocation8 + $0x3b8] sm:$0xff]
    %v1158 = vld [vmem:[#allocation8 + $0x3c0] sm:$0xff]
    %v1159 = vld [vmem:[#allocation8 + $0x3c8] sm:$0xff]
    %v1160 = vld [vmem:[#allocation8 + $0x3d0] sm:$0xff]
    %v1161 = vld [vmem:[#allocation8 + $0x3d8] sm:$0xff]
    %v1162 = vld [vmem:[#allocation8 + $0x3e0] sm:$0xff]
    %v1163 = vld [vmem:[#allocation8 + $0x3e8] sm:$0xff]
    %v1164 = vld [vmem:[#allocation8 + $0x3f0] sm:$0xff]
    %v1165 = vld [vmem:[#allocation8 + $0x3f8] sm:$0xff]
    %v1166 = vld [vmem:[%s4] sm:$0xf]
    %v1168 = vlaneseq
    %v1169 = vshrl.u32 %v1168, 7
    %v1170 = vsub.s32 0, %v1169
    %v1171 = vrot.slane %v1166, %v1170
    %v1172 = vlaneseq
    %v1173 = vshrl.u32 %v1172, 7
    %v1174 = vsub.s32 1, %v1173
    %v1175 = vrot.slane %v1166, %v1174
    %v1176 = vlaneseq
    %v1177 = vshrl.u32 %v1176, 7
    %v1178 = vsub.s32 2, %v1177
    %v1179 = vrot.slane %v1166, %v1178
    %v1180 = vlaneseq
    %v1181 = vshrl.u32 %v1180, 7
    %v1182 = vsub.s32 3, %v1181
    %v1183 = vrot.slane %v1166, %v1182
    %v1316 = vunpack.c.l.b16 %v1038
    %v1317 = vunpack.c.h.b16 %v1038
    %v1318 = vunpack.c.l.b16 %v1039
    %v1319 = vunpack.c.h.b16 %v1039
    %v1320 = vunpack.c.l.b16 %v1040
    %v1321 = vunpack.c.h.b16 %v1040
    %v1322 = vunpack.c.l.b16 %v1041
    %v1323 = vunpack.c.h.b16 %v1041
    %v1324 = vunpack.c.l.b16 %v1042
    %v1325 = vunpack.c.h.b16 %v1042
    %v1326 = vunpack.c.l.b16 %v1043
    %v1327 = vunpack.c.h.b16 %v1043
    %v1328 = vunpack.c.l.b16 %v1044
    %v1329 = vunpack.c.h.b16 %v1044
    %v1330 = vunpack.c.l.b16 %v1045
    %v1331 = vunpack.c.h.b16 %v1045
    %v1332 = vunpack.c.l.b16 %v1046
    %v1333 = vunpack.c.h.b16 %v1046
    %v1334 = vunpack.c.l.b16 %v1047
    %v1335 = vunpack.c.h.b16 %v1047
    %v1336 = vunpack.c.l.b16 %v1048
    %v1337 = vunpack.c.h.b16 %v1048
    %v1338 = vunpack.c.l.b16 %v1049
    %v1339 = vunpack.c.h.b16 %v1049
    %v1340 = vunpack.c.l.b16 %v1050
    %v1341 = vunpack.c.h.b16 %v1050
    %v1342 = vunpack.c.l.b16 %v1051
    %v1343 = vunpack.c.h.b16 %v1051
    %v1344 = vunpack.c.l.b16 %v1052
    %v1345 = vunpack.c.h.b16 %v1052
    %v1346 = vunpack.c.l.b16 %v1053
    %v1347 = vunpack.c.h.b16 %v1053
    %v1348 = vunpack.c.l.b16 %v1054
    %v1349 = vunpack.c.h.b16 %v1054
    %v1350 = vunpack.c.l.b16 %v1055
    %v1351 = vunpack.c.h.b16 %v1055
    %v1352 = vunpack.c.l.b16 %v1056
    %v1353 = vunpack.c.h.b16 %v1056
    %v1354 = vunpack.c.l.b16 %v1057
    %v1355 = vunpack.c.h.b16 %v1057
    %v1356 = vunpack.c.l.b16 %v1058
    %v1357 = vunpack.c.h.b16 %v1058
    %v1358 = vunpack.c.l.b16 %v1059
    %v1359 = vunpack.c.h.b16 %v1059
    %v1360 = vunpack.c.l.b16 %v1060
    %v1361 = vunpack.c.h.b16 %v1060
    %v1362 = vunpack.c.l.b16 %v1061
    %v1363 = vunpack.c.h.b16 %v1061
    %v1364 = vunpack.c.l.b16 %v1062
    %v1365 = vunpack.c.h.b16 %v1062
    %v1366 = vunpack.c.l.b16 %v1063
    %v1367 = vunpack.c.h.b16 %v1063
    %v1368 = vunpack.c.l.b16 %v1064
    %v1369 = vunpack.c.h.b16 %v1064
    %v1370 = vunpack.c.l.b16 %v1065
    %v1371 = vunpack.c.h.b16 %v1065
    %v1372 = vunpack.c.l.b16 %v1066
    %v1373 = vunpack.c.h.b16 %v1066
    %v1374 = vunpack.c.l.b16 %v1067
    %v1375 = vunpack.c.h.b16 %v1067
    %v1376 = vunpack.c.l.b16 %v1068
    %v1377 = vunpack.c.h.b16 %v1068
    %v1378 = vunpack.c.l.b16 %v1069
    %v1379 = vunpack.c.h.b16 %v1069
    %v1380 = vunpack.c.l.b16 %v1070
    %v1381 = vunpack.c.h.b16 %v1070
    %v1382 = vunpack.c.l.b16 %v1071
    %v1383 = vunpack.c.h.b16 %v1071
    %v1384 = vunpack.c.l.b16 %v1072
    %v1385 = vunpack.c.h.b16 %v1072
    %v1386 = vunpack.c.l.b16 %v1073
    %v1387 = vunpack.c.h.b16 %v1073
    %v1388 = vunpack.c.l.b16 %v1074
    %v1389 = vunpack.c.h.b16 %v1074
    %v1390 = vunpack.c.l.b16 %v1075
    %v1391 = vunpack.c.h.b16 %v1075
    %v1392 = vunpack.c.l.b16 %v1076
    %v1393 = vunpack.c.h.b16 %v1076
    %v1394 = vunpack.c.l.b16 %v1077
    %v1395 = vunpack.c.h.b16 %v1077
    %v1396 = vunpack.c.l.b16 %v1078
    %v1397 = vunpack.c.h.b16 %v1078
    %v1398 = vunpack.c.l.b16 %v1079
    %v1399 = vunpack.c.h.b16 %v1079
    %v1400 = vunpack.c.l.b16 %v1080
    %v1401 = vunpack.c.h.b16 %v1080
    %v1402 = vunpack.c.l.b16 %v1081
    %v1403 = vunpack.c.h.b16 %v1081
    %v1404 = vunpack.c.l.b16 %v1082
    %v1405 = vunpack.c.h.b16 %v1082
    %v1406 = vunpack.c.l.b16 %v1083
    %v1407 = vunpack.c.h.b16 %v1083
    %v1408 = vunpack.c.l.b16 %v1084
    %v1409 = vunpack.c.h.b16 %v1084
    %v1410 = vunpack.c.l.b16 %v1085
    %v1411 = vunpack.c.h.b16 %v1085
    %v1412 = vunpack.c.l.b16 %v1086
    %v1413 = vunpack.c.h.b16 %v1086
    %v1414 = vunpack.c.l.b16 %v1087
    %v1415 = vunpack.c.h.b16 %v1087
    %v1416 = vunpack.c.l.b16 %v1088
    %v1417 = vunpack.c.h.b16 %v1088
    %v1418 = vunpack.c.l.b16 %v1089
    %v1419 = vunpack.c.h.b16 %v1089
    %v1420 = vunpack.c.l.b16 %v1090
    %v1421 = vunpack.c.h.b16 %v1090
    %v1422 = vunpack.c.l.b16 %v1091
    %v1423 = vunpack.c.h.b16 %v1091
    %v1424 = vunpack.c.l.b16 %v1092
    %v1425 = vunpack.c.h.b16 %v1092
    %v1426 = vunpack.c.l.b16 %v1093
    %v1427 = vunpack.c.h.b16 %v1093
    %v1428 = vunpack.c.l.b16 %v1094
    %v1429 = vunpack.c.h.b16 %v1094
    %v1430 = vunpack.c.l.b16 %v1095
    %v1431 = vunpack.c.h.b16 %v1095
    %v1432 = vunpack.c.l.b16 %v1096
    %v1433 = vunpack.c.h.b16 %v1096
    %v1434 = vunpack.c.l.b16 %v1097
    %v1435 = vunpack.c.h.b16 %v1097
    %v1436 = vunpack.c.l.b16 %v1098
    %v1437 = vunpack.c.h.b16 %v1098
    %v1438 = vunpack.c.l.b16 %v1099
    %v1439 = vunpack.c.h.b16 %v1099
    %v1440 = vunpack.c.l.b16 %v1100
    %v1441 = vunpack.c.h.b16 %v1100
    %v1442 = vunpack.c.l.b16 %v1101
    %v1443 = vunpack.c.h.b16 %v1101
    %v1444 = vunpack.c.l.b16 %v1102
    %v1445 = vunpack.c.h.b16 %v1102
    %v1446 = vunpack.c.l.b16 %v1103
    %v1447 = vunpack.c.h.b16 %v1103
    %v1448 = vunpack.c.l.b16 %v1104
    %v1449 = vunpack.c.h.b16 %v1104
    %v1450 = vunpack.c.l.b16 %v1105
    %v1451 = vunpack.c.h.b16 %v1105
    %v1452 = vunpack.c.l.b16 %v1106
    %v1453 = vunpack.c.h.b16 %v1106
    %v1454 = vunpack.c.l.b16 %v1107
    %v1455 = vunpack.c.h.b16 %v1107
    %v1456 = vunpack.c.l.b16 %v1108
    %v1457 = vunpack.c.h.b16 %v1108
    %v1458 = vunpack.c.l.b16 %v1109
    %v1459 = vunpack.c.h.b16 %v1109
    %v1460 = vunpack.c.l.b16 %v1110
    %v1461 = vunpack.c.h.b16 %v1110
    %v1462 = vunpack.c.l.b16 %v1111
    %v1463 = vunpack.c.h.b16 %v1111
    %v1464 = vunpack.c.l.b16 %v1112
    %v1465 = vunpack.c.h.b16 %v1112
    %v1466 = vunpack.c.l.b16 %v1113
    %v1467 = vunpack.c.h.b16 %v1113
    %v1468 = vunpack.c.l.b16 %v1114
    %v1469 = vunpack.c.h.b16 %v1114
    %v1470 = vunpack.c.l.b16 %v1115
    %v1471 = vunpack.c.h.b16 %v1115
    %v1472 = vunpack.c.l.b16 %v1116
    %v1473 = vunpack.c.h.b16 %v1116
    %v1474 = vunpack.c.l.b16 %v1117
    %v1475 = vunpack.c.h.b16 %v1117
    %v1476 = vunpack.c.l.b16 %v1118
    %v1477 = vunpack.c.h.b16 %v1118
    %v1478 = vunpack.c.l.b16 %v1119
    %v1479 = vunpack.c.h.b16 %v1119
    %v1480 = vunpack.c.l.b16 %v1120
    %v1481 = vunpack.c.h.b16 %v1120
    %v1482 = vunpack.c.l.b16 %v1121
    %v1483 = vunpack.c.h.b16 %v1121
    %v1484 = vunpack.c.l.b16 %v1122
    %v1485 = vunpack.c.h.b16 %v1122
    %v1486 = vunpack.c.l.b16 %v1123
    %v1487 = vunpack.c.h.b16 %v1123
    %v1488 = vunpack.c.l.b16 %v1124
    %v1489 = vunpack.c.h.b16 %v1124
    %v1490 = vunpack.c.l.b16 %v1125
    %v1491 = vunpack.c.h.b16 %v1125
    %v1492 = vunpack.c.l.b16 %v1126
    %v1493 = vunpack.c.h.b16 %v1126
    %v1494 = vunpack.c.l.b16 %v1127
    %v1495 = vunpack.c.h.b16 %v1127
    %v1496 = vunpack.c.l.b16 %v1128
    %v1497 = vunpack.c.h.b16 %v1128
    %v1498 = vunpack.c.l.b16 %v1129
    %v1499 = vunpack.c.h.b16 %v1129
    %v1500 = vunpack.c.l.b16 %v1130
    %v1501 = vunpack.c.h.b16 %v1130
    %v1502 = vunpack.c.l.b16 %v1131
    %v1503 = vunpack.c.h.b16 %v1131
    %v1504 = vunpack.c.l.b16 %v1132
    %v1505 = vunpack.c.h.b16 %v1132
    %v1506 = vunpack.c.l.b16 %v1133
    %v1507 = vunpack.c.h.b16 %v1133
    %v1508 = vunpack.c.l.b16 %v1134
    %v1509 = vunpack.c.h.b16 %v1134
    %v1510 = vunpack.c.l.b16 %v1135
    %v1511 = vunpack.c.h.b16 %v1135
    %v1512 = vunpack.c.l.b16 %v1136
    %v1513 = vunpack.c.h.b16 %v1136
    %v1514 = vunpack.c.l.b16 %v1137
    %v1515 = vunpack.c.h.b16 %v1137
    %v1516 = vunpack.c.l.b16 %v1138
    %v1517 = vunpack.c.h.b16 %v1138
    %v1518 = vunpack.c.l.b16 %v1139
    %v1519 = vunpack.c.h.b16 %v1139
    %v1520 = vunpack.c.l.b16 %v1140
    %v1521 = vunpack.c.h.b16 %v1140
    %v1522 = vunpack.c.l.b16 %v1141
    %v1523 = vunpack.c.h.b16 %v1141
    %v1524 = vunpack.c.l.b16 %v1142
    %v1525 = vunpack.c.h.b16 %v1142
    %v1526 = vunpack.c.l.b16 %v1143
    %v1527 = vunpack.c.h.b16 %v1143
    %v1528 = vunpack.c.l.b16 %v1144
    %v1529 = vunpack.c.h.b16 %v1144
    %v1530 = vunpack.c.l.b16 %v1145
    %v1531 = vunpack.c.h.b16 %v1145
    %v1532 = vunpack.c.l.b16 %v1146
    %v1533 = vunpack.c.h.b16 %v1146
    %v1534 = vunpack.c.l.b16 %v1147
    %v1535 = vunpack.c.h.b16 %v1147
    %v1536 = vunpack.c.l.b16 %v1148
    %v1537 = vunpack.c.h.b16 %v1148
    %v1538 = vunpack.c.l.b16 %v1149
    %v1539 = vunpack.c.h.b16 %v1149
    %v1540 = vunpack.c.l.b16 %v1150
    %v1541 = vunpack.c.h.b16 %v1150
    %v1542 = vunpack.c.l.b16 %v1151
    %v1543 = vunpack.c.h.b16 %v1151
    %v1544 = vunpack.c.l.b16 %v1152
    %v1545 = vunpack.c.h.b16 %v1152
    %v1546 = vunpack.c.l.b16 %v1153
    %v1547 = vunpack.c.h.b16 %v1153
    %v1548 = vunpack.c.l.b16 %v1154
    %v1549 = vunpack.c.h.b16 %v1154
    %v1550 = vunpack.c.l.b16 %v1155
    %v1551 = vunpack.c.h.b16 %v1155
    %v1552 = vunpack.c.l.b16 %v1156
    %v1553 = vunpack.c.h.b16 %v1156
    %v1554 = vunpack.c.l.b16 %v1157
    %v1555 = vunpack.c.h.b16 %v1157
    %v1556 = vunpack.c.l.b16 %v1158
    %v1557 = vunpack.c.h.b16 %v1158
    %v1558 = vunpack.c.l.b16 %v1159
    %v1559 = vunpack.c.h.b16 %v1159
    %v1560 = vunpack.c.l.b16 %v1160
    %v1561 = vunpack.c.h.b16 %v1160
    %v1562 = vunpack.c.l.b16 %v1161
    %v1563 = vunpack.c.h.b16 %v1161
    %v1564 = vunpack.c.l.b16 %v1162
    %v1565 = vunpack.c.h.b16 %v1162
    %v1566 = vunpack.c.l.b16 %v1163
    %v1567 = vunpack.c.h.b16 %v1163
    %v1568 = vunpack.c.l.b16 %v1164
    %v1569 = vunpack.c.h.b16 %v1164
    %v1570 = vunpack.c.l.b16 %v1165
    %v1571 = vunpack.c.h.b16 %v1165
    %v1572 = vpack.c.b16 %v1320, %v1316
    %v1573 = vpack.c.b16 %v1321, %v1317
    %v1574 = vpack.c.b16 %v1322, %v1318
    %v1575 = vpack.c.b16 %v1323, %v1319
    %v1576 = vpack.c.b16 %v1328, %v1324
    %v1577 = vpack.c.b16 %v1329, %v1325
    %v1578 = vpack.c.b16 %v1330, %v1326
    %v1579 = vpack.c.b16 %v1331, %v1327
    %v1580 = vpack.c.b16 %v1336, %v1332
    %v1581 = vpack.c.b16 %v1337, %v1333
    %v1582 = vpack.c.b16 %v1338, %v1334
    %v1583 = vpack.c.b16 %v1339, %v1335
    %v1584 = vpack.c.b16 %v1344, %v1340
    %v1585 = vpack.c.b16 %v1345, %v1341
    %v1586 = vpack.c.b16 %v1346, %v1342
    %v1587 = vpack.c.b16 %v1347, %v1343
    %v1588 = vpack.c.b16 %v1352, %v1348
    %v1589 = vpack.c.b16 %v1353, %v1349
    %v1590 = vpack.c.b16 %v1354, %v1350
    %v1591 = vpack.c.b16 %v1355, %v1351
    %v1592 = vpack.c.b16 %v1360, %v1356
    %v1593 = vpack.c.b16 %v1361, %v1357
    %v1594 = vpack.c.b16 %v1362, %v1358
    %v1595 = vpack.c.b16 %v1363, %v1359
    %v1596 = vpack.c.b16 %v1368, %v1364
    %v1597 = vpack.c.b16 %v1369, %v1365
    %v1598 = vpack.c.b16 %v1370, %v1366
    %v1599 = vpack.c.b16 %v1371, %v1367
    %v1600 = vpack.c.b16 %v1376, %v1372
    %v1601 = vpack.c.b16 %v1377, %v1373
    %v1602 = vpack.c.b16 %v1378, %v1374
    %v1603 = vpack.c.b16 %v1379, %v1375
    %v1604 = vpack.c.b16 %v1384, %v1380
    %v1605 = vpack.c.b16 %v1385, %v1381
    %v1606 = vpack.c.b16 %v1386, %v1382
    %v1607 = vpack.c.b16 %v1387, %v1383
    %v1608 = vpack.c.b16 %v1392, %v1388
    %v1609 = vpack.c.b16 %v1393, %v1389
    %v1610 = vpack.c.b16 %v1394, %v1390
    %v1611 = vpack.c.b16 %v1395, %v1391
    %v1612 = vpack.c.b16 %v1400, %v1396
    %v1613 = vpack.c.b16 %v1401, %v1397
    %v1614 = vpack.c.b16 %v1402, %v1398
    %v1615 = vpack.c.b16 %v1403, %v1399
    %v1616 = vpack.c.b16 %v1408, %v1404
    %v1617 = vpack.c.b16 %v1409, %v1405
    %v1618 = vpack.c.b16 %v1410, %v1406
    %v1619 = vpack.c.b16 %v1411, %v1407
    %v1620 = vpack.c.b16 %v1416, %v1412
    %v1621 = vpack.c.b16 %v1417, %v1413
    %v1622 = vpack.c.b16 %v1418, %v1414
    %v1623 = vpack.c.b16 %v1419, %v1415
    %v1624 = vpack.c.b16 %v1424, %v1420
    %v1625 = vpack.c.b16 %v1425, %v1421
    %v1626 = vpack.c.b16 %v1426, %v1422
    %v1627 = vpack.c.b16 %v1427, %v1423
    %v1628 = vpack.c.b16 %v1432, %v1428
    %v1629 = vpack.c.b16 %v1433, %v1429
    %v1630 = vpack.c.b16 %v1434, %v1430
    %v1631 = vpack.c.b16 %v1435, %v1431
    %v1632 = vpack.c.b16 %v1440, %v1436
    %v1633 = vpack.c.b16 %v1441, %v1437
    %v1634 = vpack.c.b16 %v1442, %v1438
    %v1635 = vpack.c.b16 %v1443, %v1439
    %v1636 = vpack.c.b16 %v1448, %v1444
    %v1637 = vpack.c.b16 %v1449, %v1445
    %v1638 = vpack.c.b16 %v1450, %v1446
    %v1639 = vpack.c.b16 %v1451, %v1447
    %v1640 = vpack.c.b16 %v1456, %v1452
    %v1641 = vpack.c.b16 %v1457, %v1453
    %v1642 = vpack.c.b16 %v1458, %v1454
    %v1643 = vpack.c.b16 %v1459, %v1455
    %v1644 = vpack.c.b16 %v1464, %v1460
    %v1645 = vpack.c.b16 %v1465, %v1461
    %v1646 = vpack.c.b16 %v1466, %v1462
    %v1647 = vpack.c.b16 %v1467, %v1463
    %v1648 = vpack.c.b16 %v1472, %v1468
    %v1649 = vpack.c.b16 %v1473, %v1469
    %v1650 = vpack.c.b16 %v1474, %v1470
    %v1651 = vpack.c.b16 %v1475, %v1471
    %v1652 = vpack.c.b16 %v1480, %v1476
    %v1653 = vpack.c.b16 %v1481, %v1477
    %v1654 = vpack.c.b16 %v1482, %v1478
    %v1655 = vpack.c.b16 %v1483, %v1479
    %v1656 = vpack.c.b16 %v1488, %v1484
    %v1657 = vpack.c.b16 %v1489, %v1485
    %v1658 = vpack.c.b16 %v1490, %v1486
    %v1659 = vpack.c.b16 %v1491, %v1487
    %v1660 = vpack.c.b16 %v1496, %v1492
    %v1661 = vpack.c.b16 %v1497, %v1493
    %v1662 = vpack.c.b16 %v1498, %v1494
    %v1663 = vpack.c.b16 %v1499, %v1495
    %v1664 = vpack.c.b16 %v1504, %v1500
    %v1665 = vpack.c.b16 %v1505, %v1501
    %v1666 = vpack.c.b16 %v1506, %v1502
    %v1667 = vpack.c.b16 %v1507, %v1503
    %v1668 = vpack.c.b16 %v1512, %v1508
    %v1669 = vpack.c.b16 %v1513, %v1509
    %v1670 = vpack.c.b16 %v1514, %v1510
    %v1671 = vpack.c.b16 %v1515, %v1511
    %v1672 = vpack.c.b16 %v1520, %v1516
    %v1673 = vpack.c.b16 %v1521, %v1517
    %v1674 = vpack.c.b16 %v1522, %v1518
    %v1675 = vpack.c.b16 %v1523, %v1519
    %v1676 = vpack.c.b16 %v1528, %v1524
    %v1677 = vpack.c.b16 %v1529, %v1525
    %v1678 = vpack.c.b16 %v1530, %v1526
    %v1679 = vpack.c.b16 %v1531, %v1527
    %v1680 = vpack.c.b16 %v1536, %v1532
    %v1681 = vpack.c.b16 %v1537, %v1533
    %v1682 = vpack.c.b16 %v1538, %v1534
    %v1683 = vpack.c.b16 %v1539, %v1535
    %v1684 = vpack.c.b16 %v1544, %v1540
    %v1685 = vpack.c.b16 %v1545, %v1541
    %v1686 = vpack.c.b16 %v1546, %v1542
    %v1687 = vpack.c.b16 %v1547, %v1543
    %v1688 = vpack.c.b16 %v1552, %v1548
    %v1689 = vpack.c.b16 %v1553, %v1549
    %v1690 = vpack.c.b16 %v1554, %v1550
    %v1691 = vpack.c.b16 %v1555, %v1551
    %v1692 = vpack.c.b16 %v1560, %v1556
    %v1693 = vpack.c.b16 %v1561, %v1557
    %v1694 = vpack.c.b16 %v1562, %v1558
    %v1695 = vpack.c.b16 %v1563, %v1559
    %v1696 = vpack.c.b16 %v1568, %v1564
    %v1697 = vpack.c.b16 %v1569, %v1565
    %v1698 = vpack.c.b16 %v1570, %v1566
    %v1699 = vpack.c.b16 %v1571, %v1567
    %1828 = vmatprep.subr.bf16.mxu0 %v1601
    %1829 = vmatpush1.bf16.xpose.msra.mxu0 %v1600
    %1830 = vmatprep.subr.bf16.mxu0 %v1597
    %1831 = vmatpush1.bf16.xpose.msra.mxu0 %v1596
    %1832 = vmatprep.subr.bf16.mxu0 %v1593
    %1833 = vmatpush1.bf16.xpose.msra.mxu0 %v1592
    %1834 = vmatprep.subr.bf16.mxu0 %v1589
    %1835 = vmatpush1.bf16.xpose.msra.mxu0 %v1588
    %1836 = vmatprep.subr.bf16.mxu0 %v1585
    %1837 = vmatpush1.bf16.xpose.msra.mxu0 %v1584
    %1838 = vmatprep.subr.bf16.mxu0 %v1581
    %1839 = vmatpush1.bf16.xpose.msra.mxu0 %v1580
    %1840 = vmatprep.subr.bf16.mxu0 %v1577
    %1841 = vmatpush1.bf16.xpose.msra.mxu0 %v1576
    %1842 = vmatprep.subr.bf16.mxu0 %v1573
    %1843 = vmatpush1.bf16.xpose.msra.mxu0 %v1572
    %1844 = vmatprep.subr.bf16.mxu0 %v1633
    %1845 = vmatpush2.bf16.xpose.msra.mxu0 %v1632
    %1846 = vmatprep.subr.bf16.mxu0 %v1629
    %1847 = vmatpush2.bf16.xpose.msra.mxu0 %v1628
    %1848 = vmatprep.subr.bf16.mxu0 %v1625
    %1849 = vmatpush2.bf16.xpose.msra.mxu0 %v1624
    %1850 = vmatprep.subr.bf16.mxu0 %v1621
    %1851 = vmatpush2.bf16.xpose.msra.mxu0 %v1620
    %1852 = vmatprep.subr.bf16.mxu0 %v1617
    %1853 = vmatpush2.bf16.xpose.msra.mxu0 %v1616
    %1854 = vmatprep.subr.bf16.mxu0 %v1613
    %1855 = vmatpush2.bf16.xpose.msra.mxu0 %v1612
    %1856 = vmatprep.subr.bf16.mxu0 %v1609
    %1857 = vmatpush2.bf16.xpose.msra.mxu0 %v1608
    %1858 = vmatprep.subr.bf16.mxu0 %v1605
    %1859 = vmatpush2.bf16.xpose.msra.mxu0 %v1604
    %1860 = vmatprep.mubr.bf16.mxu0 %v1035
    %1861 = vmatmul.mubr.bf16.gmra.mxu0 %v1034
    %v1862 = vpop.f32.mrf.mxu0
    %v1863 = vadd.f32 %v1171, %v1862
    %v1864 = vpop.f32.mrf.mxu0
    %v1865 = vadd.f32 %v1175, %v1864
    %v1866 = vpop.f32.mrf.mxu0
    %v1867 = vpop.f32.mrf.mxu0
    %1868 = vdwg.mxu0
    %1869 = vmatprep.subr.bf16.mxu0 %v1603
    %1870 = vmatpush1.bf16.xpose.msra.mxu0 %v1602
    %1871 = vmatprep.subr.bf16.mxu0 %v1599
    %1872 = vmatpush1.bf16.xpose.msra.mxu0 %v1598
    %1873 = vmatprep.subr.bf16.mxu0 %v1595
    %1874 = vmatpush1.bf16.xpose.msra.mxu0 %v1594
    %1875 = vmatprep.subr.bf16.mxu0 %v1591
    %1876 = vmatpush1.bf16.xpose.msra.mxu0 %v1590
    %1877 = vmatprep.subr.bf16.mxu0 %v1587
    %1878 = vmatpush1.bf16.xpose.msra.mxu0 %v1586
    %1879 = vmatprep.subr.bf16.mxu0 %v1583
    %1880 = vmatpush1.bf16.xpose.msra.mxu0 %v1582
    %1881 = vmatprep.subr.bf16.mxu0 %v1579
    %1882 = vmatpush1.bf16.xpose.msra.mxu0 %v1578
    %1883 = vmatprep.subr.bf16.mxu0 %v1575
    %1884 = vmatpush1.bf16.xpose.msra.mxu0 %v1574
    %1885 = vmatprep.subr.bf16.mxu0 %v1635
    %1886 = vmatpush2.bf16.xpose.msra.mxu0 %v1634
    %1887 = vmatprep.subr.bf16.mxu0 %v1631
    %1888 = vmatpush2.bf16.xpose.msra.mxu0 %v1630
    %1889 = vmatprep.subr.bf16.mxu0 %v1627
    %1890 = vmatpush2.bf16.xpose.msra.mxu0 %v1626
    %1891 = vmatprep.subr.bf16.mxu0 %v1623
    %1892 = vmatpush2.bf16.xpose.msra.mxu0 %v1622
    %1893 = vmatprep.subr.bf16.mxu0 %v1619
    %1894 = vmatpush2.bf16.xpose.msra.mxu0 %v1618
    %1895 = vmatprep.subr.bf16.mxu0 %v1615
    %1896 = vmatpush2.bf16.xpose.msra.mxu0 %v1614
    %1897 = vmatprep.subr.bf16.mxu0 %v1611
    %1898 = vmatpush2.bf16.xpose.msra.mxu0 %v1610
    %1899 = vmatprep.subr.bf16.mxu0 %v1607
    %1900 = vmatpush2.bf16.xpose.msra.mxu0 %v1606
    %1901 = vmatprep.mubr.bf16.mxu0 %v1037
    %1902 = vmatmul.mubr.bf16.gmra.mxu0 %v1036
    %v1903 = vpop.f32.mrf.mxu0
    %v1904 = vadd.f32 %v1863, %v1903
    %v1905 = vpop.f32.mrf.mxu0
    %v1906 = vadd.f32 %v1865, %v1905
    %v1907 = vpop.f32.mrf.mxu0
    %v1908 = vpop.f32.mrf.mxu0
    %1909 = vdwg.mxu0
    %1910 = vmatprep.subr.bf16.mxu0 %v1665
    %1911 = vmatpush1.bf16.xpose.msra.mxu0 %v1664
    %1912 = vmatprep.subr.bf16.mxu0 %v1661
    %1913 = vmatpush1.bf16.xpose.msra.mxu0 %v1660
    %1914 = vmatprep.subr.bf16.mxu0 %v1657
    %1915 = vmatpush1.bf16.xpose.msra.mxu0 %v1656
    %1916 = vmatprep.subr.bf16.mxu0 %v1653
    %1917 = vmatpush1.bf16.xpose.msra.mxu0 %v1652
    %1918 = vmatprep.subr.bf16.mxu0 %v1649
    %1919 = vmatpush1.bf16.xpose.msra.mxu0 %v1648
    %1920 = vmatprep.subr.bf16.mxu0 %v1645
    %1921 = vmatpush1.bf16.xpose.msra.mxu0 %v1644
    %1922 = vmatprep.subr.bf16.mxu0 %v1641
    %1923 = vmatpush1.bf16.xpose.msra.mxu0 %v1640
    %1924 = vmatprep.subr.bf16.mxu0 %v1637
    %1925 = vmatpush1.bf16.xpose.msra.mxu0 %v1636
    %1926 = vmatprep.subr.bf16.mxu0 %v1697
    %1927 = vmatpush2.bf16.xpose.msra.mxu0 %v1696
    %1928 = vmatprep.subr.bf16.mxu0 %v1693
    %1929 = vmatpush2.bf16.xpose.msra.mxu0 %v1692
    %1930 = vmatprep.subr.bf16.mxu0 %v1689
    %1931 = vmatpush2.bf16.xpose.msra.mxu0 %v1688
    %1932 = vmatprep.subr.bf16.mxu0 %v1685
    %1933 = vmatpush2.bf16.xpose.msra.mxu0 %v1684
    %1934 = vmatprep.subr.bf16.mxu0 %v1681
    %1935 = vmatpush2.bf16.xpose.msra.mxu0 %v1680
    %1936 = vmatprep.subr.bf16.mxu0 %v1677
    %1937 = vmatpush2.bf16.xpose.msra.mxu0 %v1676
    %1938 = vmatprep.subr.bf16.mxu0 %v1673
    %1939 = vmatpush2.bf16.xpose.msra.mxu0 %v1672
    %1940 = vmatprep.subr.bf16.mxu0 %v1669
    %1941 = vmatpush2.bf16.xpose.msra.mxu0 %v1668
    %1942 = vmatprep.mubr.bf16.mxu0 %v1035
    %1943 = vmatmul.mubr.bf16.gmra.mxu0 %v1034
    %v1944 = vpop.f32.mrf.mxu0
    %v1945 = vadd.f32 %v1179, %v1944
    %v1946 = vpop.f32.mrf.mxu0
    %v1947 = vadd.f32 %v1183, %v1946
    %v1948 = vpop.f32.mrf.mxu0
    %v1949 = vpop.f32.mrf.mxu0
    %1950 = vdwg.mxu0
    %1951 = vmatprep.subr.bf16.mxu0 %v1667
    %1952 = vmatpush1.bf16.xpose.msra.mxu0 %v1666
    %1953 = vmatprep.subr.bf16.mxu0 %v1663
    %1954 = vmatpush1.bf16.xpose.msra.mxu0 %v1662
    %1955 = vmatprep.subr.bf16.mxu0 %v1659
    %1956 = vmatpush1.bf16.xpose.msra.mxu0 %v1658
    %1957 = vmatprep.subr.bf16.mxu0 %v1655
    %1958 = vmatpush1.bf16.xpose.msra.mxu0 %v1654
    %1959 = vmatprep.subr.bf16.mxu0 %v1651
    %1960 = vmatpush1.bf16.xpose.msra.mxu0 %v1650
    %1961 = vmatprep.subr.bf16.mxu0 %v1647
    %1962 = vmatpush1.bf16.xpose.msra.mxu0 %v1646
    %1963 = vmatprep.subr.bf16.mxu0 %v1643
    %1964 = vmatpush1.bf16.xpose.msra.mxu0 %v1642
    %1965 = vmatprep.subr.bf16.mxu0 %v1639
    %1966 = vmatpush1.bf16.xpose.msra.mxu0 %v1638
    %1967 = vmatprep.subr.bf16.mxu0 %v1699
    %1968 = vmatpush2.bf16.xpose.msra.mxu0 %v1698
    %1969 = vmatprep.subr.bf16.mxu0 %v1695
    %1970 = vmatpush2.bf16.xpose.msra.mxu0 %v1694
    %1971 = vmatprep.subr.bf16.mxu0 %v1691
    %1972 = vmatpush2.bf16.xpose.msra.mxu0 %v1690
    %1973 = vmatprep.subr.bf16.mxu0 %v1687
    %1974 = vmatpush2.bf16.xpose.msra.mxu0 %v1686
    %1975 = vmatprep.subr.bf16.mxu0 %v1683
    %1976 = vmatpush2.bf16.xpose.msra.mxu0 %v1682
    %1977 = vmatprep.subr.bf16.mxu0 %v1679
    %1978 = vmatpush2.bf16.xpose.msra.mxu0 %v1678
    %1979 = vmatprep.subr.bf16.mxu0 %v1675
    %1980 = vmatpush2.bf16.xpose.msra.mxu0 %v1674
    %1981 = vmatprep.subr.bf16.mxu0 %v1671
    %1982 = vmatpush2.bf16.xpose.msra.mxu0 %v1670
    %1983 = vmatprep.mubr.bf16.mxu0 %v1037
    %1984 = vmatmul.mubr.bf16.gmra.mxu0 %v1036
    %v1985 = vpop.f32.mrf.mxu0
    %v1986 = vadd.f32 %v1945, %v1985
    %v1987 = vpop.f32.mrf.mxu0
    %v1988 = vadd.f32 %v1947, %v1987
    %v1989 = vpop.f32.mrf.mxu0
    %v1990 = vpop.f32.mrf.mxu0
    %1991 = vdwg.mxu0
    %1992 = vst [vmem:[#allocation10] sm:$0xff] %v1904
    %1993 = vst [vmem:[#allocation10 + $0x8] sm:$0xff] %v1906
    %1994 = vst [vmem:[#allocation10 + $0x10] sm:$0xff] %v1986
    %1995 = vst [vmem:[#allocation10 + $0x18] sm:$0xff] %v1988
    // Predicated region
    $region38: #{tpu_custom_call.1} parent=1 // pred_check
      _
    $region39: #{tpu_custom_call.1} parent=1 // pred_check_branch
      %1997 = sbr.rel (0) target = $region41
    $region40: #{tpu_custom_call.1} parent=1 // pred_region
      %s1999 = ssub.s32 512, 512
      %2000 = vsyncadd [#allocation4], %s1999
      %s2002 = sshll.u32 [#allocation10], 4
      %s2003 = int_to_ptr.vmem [resolvable:$true] %s2002
      %2005 = dma.vmem_to_hbm [thread:$0]  %s2003, 512, %s5, [#allocation4]
    $region41: #{tpu_custom_call.1} parent=1 // pred_fallthru
      _
    // Predicated region
    $region42: #{tpu_custom_call.1} parent=1 // pred_check
      _
    $region43: #{tpu_custom_call.1} parent=1 // pred_check_branch
      %2007 = sbr.rel (0) target = $region45
    $region44: #{tpu_custom_call.1} parent=1 // pred_region
      %2008 = dma.done [#allocation4], 512
    $region45: #{tpu_custom_call.1} parent=1 // pred_fallthru
      _
    %2009 = vsyncpa [#allocation3], 1
    %2010 = vsyncpa [#allocation6], 1
    %2011 = vsyncpa [#allocation9], 1
    %2012 = vsyncpa [#allocation4], 1

</llo_original>
